<compile_context>
chip_gen: v7x
topology: tpu7x:2x2x1
jax: 0.10.0
libtpu: 0.0.40
codegen_flags: <defaults>
</compile_context>

<pallas_src>
import functools

import jax
import jax.numpy as jnp
from jax.experimental import pallas as pl
from jax.experimental.pallas import tpu as pltpu


def _lstm_kernel(x_ref, wx_ref, wh_ref, b_ref, o_ref):
    """Whole-sequence LSTM. Gate packing order: [forget, input, output, cand].

    x_ref : (B, T, D)   input sequence (batch-major, as given by the module)
    wx_ref: (D, 4H)     input->gates weights
    wh_ref: (H, 4H)     hidden->gates weights
    b_ref : (1, 4H)     gate biases
    o_ref : (B, T, H)   hidden states in REVERSED time order (prepend semantics)
    """
    B, T, _ = x_ref.shape
    H = o_ref.shape[2]

    wx = wx_ref[...]
    wh = wh_ref[...]
    b = b_ref[...]

    c = jnp.zeros((B, H), jnp.float32)
    h = jnp.zeros((B, H), jnp.float32)

    # T is small & static here, so a full unroll with static indices is both
    # the simplest and fastest structure (no dynamic sublane indexing needed).
    # TODO(synk): for long sequences, switch to lax.fori_loop (or a time grid
    # marked "arbitrary") with pl.ds dynamic time indexing to bound live ranges.
    for t in range(T):
        x_t = x_ref[:, t, :]                                   # (B, D), static slice
        z = (jnp.dot(x_t, wx, preferred_element_type=jnp.float32)
             + jnp.dot(h, wh, preferred_element_type=jnp.float32)
             + b)                                              # (B, 4H)

        # Full-width EUP calls, then static lane slices per gate.
        s = jax.nn.sigmoid(z)
        g = jnp.tanh(z)
        f_t = s[:, 0 * H:1 * H]
        i_t = s[:, 1 * H:2 * H]
        o_t = s[:, 2 * H:3 * H]
        g_t = g[:, 3 * H:4 * H]

        c = f_t * c + i_t * g_t
        h = o_t * jnp.tanh(c)

        # Prepend semantics: h_t lands in time slot T-1-t. These are cheap
        # in-VMEM stores; the single output DMA happens once at kernel end.
        o_ref[:, T - 1 - t, :] = h


def my_lstm_forward(x_btd, w_x, w_h, b, hidden_size):
    """x_btd: (B, T, D) float32. Returns (B, T, H) with reversed time order,
    matching the PyTorch module's prepend-concat behaviour."""
    B, T, _ = x_btd.shape
    H = hidden_size
    return pl.pallas_call(
        _lstm_kernel,
        out_shape=jax.ShapeDtypeStruct((B, T, H), jnp.float32),
        in_specs=[
            pl.BlockSpec(memory_space=pltpu.MemorySpace.VMEM),  # x
            pl.BlockSpec(memory_space=pltpu.MemorySpace.VMEM),  # w_x
            pl.BlockSpec(memory_space=pltpu.MemorySpace.VMEM),  # w_h
            pl.BlockSpec(memory_space=pltpu.MemorySpace.VMEM),  # b
        ],
        out_specs=pl.BlockSpec(memory_space=pltpu.MemorySpace.VMEM),
    )(x_btd, w_x, w_h, b)


def _reference_lstm(x_btd, w_x, w_h, b, hidden_size):
    """Pure-JAX reference mirroring the PyTorch module semantics."""
    B, T, _ = x_btd.shape
    H = hidden_size
    c = jnp.zeros((B, H), jnp.float32)
    h = jnp.zeros((B, H), jnp.float32)
    outs = None
    for i in range(T):
        z = x_btd[:, i, :] @ w_x + h @ w_h + b
        f_t = jax.nn.sigmoid(z[:, 0 * H:1 * H])
        i_t = jax.nn.sigmoid(z[:, 1 * H:2 * H])
        o_t = jax.nn.sigmoid(z[:, 2 * H:3 * H])
        g_t = jnp.tanh(z[:, 3 * H:4 * H])
        c = f_t * c + i_t * g_t
        h = o_t * jnp.tanh(c)
        hh = h[:, None, :]
        outs = hh if outs is None else jnp.concatenate([hh, outs], axis=1)
    return outs


def init_params(key, input_size, hidden_size):
    """Deterministic nn.Linear-style init for the 4 gate layers, packed as
    split weights w_x (D,4H), w_h (H,4H) and bias (1,4H):
    gate order [forget, input, output, cand]."""
    fan_in = input_size + hidden_size
    bound = 1.0 / jnp.sqrt(jnp.float32(fan_in))
    kw, kb = jax.random.split(key)
    w_all = jax.random.uniform(
        kw, (fan_in, 4 * hidden_size), jnp.float32, -bound, bound)
    b_all = jax.random.uniform(
        kb, (1, 4 * hidden_size), jnp.float32, -bound, bound)
    return w_all[:input_size], w_all[input_size:], b_all


if __name__ == "__main__":
    # Small shapes consistent with the module: batch=2, seq=8, input=16, hidden=32.
    batch, seq, input_size, hidden_size = 2, 8, 16, 32
    key = jax.random.PRNGKey(0)
    k_x, k_p = jax.random.split(key)

    x = jax.random.normal(k_x, (batch, seq, input_size), jnp.float32)
    w_x, w_h, b = init_params(k_p, input_size, hidden_size)

    run = jax.jit(functools.partial(my_lstm_forward, hidden_size=hidden_size))
    out = jax.block_until_ready(run(x, w_x, w_h, b))

    ref = _reference_lstm(x, w_x, w_h, b, hidden_size)
    assert out.shape == (batch, seq, hidden_size)
    assert jnp.allclose(out, ref, atol=1e-5, rtol=1e-5)

    print("KERNEL_OK")
</pallas_src>

<mosaic_0001>
module attributes {stable_mosaic.version = 11 : i64} {
  func.func @_lstm_kernel(%arg0: memref<2x8x16xf32, #tpu.memory_space<vmem>>, %arg1: memref<16x128xf32, #tpu.memory_space<vmem>>, %arg2: memref<32x128xf32, #tpu.memory_space<vmem>>, %arg3: memref<1x128xf32, #tpu.memory_space<vmem>>, %arg4: memref<2x8x32xf32, #tpu.memory_space<vmem>>) attributes {dimension_semantics = [], scalar_prefetch = 0 : i64, scratch_operands = 0 : i64, tpu.core_type = #tpu.core_type<tc>} {
    %c0 = arith.constant 0 : index
    %c0_0 = arith.constant 0 : index
    %0 = vector.load %arg1[%c0, %c0_0] : memref<16x128xf32, #tpu.memory_space<vmem>>, vector<16x128xf32>
    %c0_1 = arith.constant 0 : index
    %c0_2 = arith.constant 0 : index
    %1 = vector.load %arg2[%c0_1, %c0_2] : memref<32x128xf32, #tpu.memory_space<vmem>>, vector<32x128xf32>
    %c0_3 = arith.constant 0 : index
    %c0_4 = arith.constant 0 : index
    %2 = vector.load %arg3[%c0_3, %c0_4] : memref<1x128xf32, #tpu.memory_space<vmem>>, vector<1x128xf32>
    %cst = arith.constant 0.000000e+00 : f32
    %3 = vector.broadcast %cst : f32 to vector<2x32xf32>
    %cst_5 = arith.constant 0.000000e+00 : f32
    %4 = vector.broadcast %cst_5 : f32 to vector<2x32xf32>
    %c0_6 = arith.constant 0 : index
    %c0_7 = arith.constant 0 : index
    %c0_8 = arith.constant 0 : index
    %5 = vector.load %arg0[%c0_6, %c0_7, %c0_8] : memref<2x8x16xf32, #tpu.memory_space<vmem>>, vector<2x1x16xf32>
    %6 = vector.shape_cast %5 : vector<2x1x16xf32> to vector<2x16xf32>
    %cst_9 = arith.constant dense<0.000000e+00> : vector<2x128xf32>
    %7 = tpu.matmul %6, %0, %cst_9 {dimension_numbers = #tpu.dot_dimension_numbers<[1], [0], [0], [1], [0, 0, 1, 1], [], []>} : vector<2x16xf32>, vector<16x128xf32>, vector<2x128xf32> -> vector<2x128xf32>
    %cst_10 = arith.constant dense<0.000000e+00> : vector<2x128xf32>
    %8 = tpu.matmul %4, %1, %cst_10 {dimension_numbers = #tpu.dot_dimension_numbers<[1], [0], [0], [1], [0, 0, 1, 1], [], []>} : vector<2x32xf32>, vector<32x128xf32>, vector<2x128xf32> -> vector<2x128xf32>
    %9 = arith.addf %7, %8 : vector<2x128xf32>
    %10 = vector.broadcast %2 : vector<1x128xf32> to vector<2x128xf32>
    %11 = arith.addf %9, %10 : vector<2x128xf32>
    %12 = arith.negf %11 : vector<2x128xf32>
    %13 = math.exp %12 : vector<2x128xf32>
    %cst_11 = arith.constant 1.000000e+00 : f32
    %14 = vector.broadcast %cst_11 : f32 to vector<2x128xf32>
    %15 = arith.addf %14, %13 : vector<2x128xf32>
    %16 = arith.divf %14, %15 : vector<2x128xf32>
    %17 = math.tanh %11 : vector<2x128xf32>
    %18 = vector.extract_strided_slice %16 {offsets = [0, 0], sizes = [2, 32], strides = [1, 1]} : vector<2x128xf32> to vector<2x32xf32>
    %19 = vector.extract_strided_slice %16 {offsets = [0, 32], sizes = [2, 32], strides = [1, 1]} : vector<2x128xf32> to vector<2x32xf32>
    %20 = vector.extract_strided_slice %16 {offsets = [0, 64], sizes = [2, 32], strides = [1, 1]} : vector<2x128xf32> to vector<2x32xf32>
    %21 = vector.extract_strided_slice %17 {offsets = [0, 96], sizes = [2, 32], strides = [1, 1]} : vector<2x128xf32> to vector<2x32xf32>
    %22 = arith.mulf %18, %3 : vector<2x32xf32>
    %23 = arith.mulf %19, %21 : vector<2x32xf32>
    %24 = arith.addf %22, %23 : vector<2x32xf32>
    %25 = math.tanh %24 : vector<2x32xf32>
    %26 = arith.mulf %20, %25 : vector<2x32xf32>
    %c0_12 = arith.constant 0 : index
    %c7 = arith.constant 7 : index
    %c0_13 = arith.constant 0 : index
    %27 = vector.load %arg4[%c0_12, %c7, %c0_13] : memref<2x8x32xf32, #tpu.memory_space<vmem>>, vector<2x1x32xf32>
    %28 = vector.shape_cast %27 : vector<2x1x32xf32> to vector<2x32xf32>
    %29 = vector.shape_cast %26 : vector<2x32xf32> to vector<2x1x32xf32>
    tpu.vector_store %arg4[%c0_12, %c7, %c0_13], %29 {strides = array<i32>} : memref<2x8x32xf32, #tpu.memory_space<vmem>>, vector<2x1x32xf32>,
    %c0_14 = arith.constant 0 : index
    %c1 = arith.constant 1 : index
    %c0_15 = arith.constant 0 : index
    %30 = vector.load %arg0[%c0_14, %c1, %c0_15] : memref<2x8x16xf32, #tpu.memory_space<vmem>>, vector<2x1x16xf32>
    %31 = vector.shape_cast %30 : vector<2x1x16xf32> to vector<2x16xf32>
    %cst_16 = arith.constant dense<0.000000e+00> : vector<2x128xf32>
    %32 = tpu.matmul %31, %0, %cst_16 {dimension_numbers = #tpu.dot_dimension_numbers<[1], [0], [0], [1], [0, 0, 1, 1], [], []>} : vector<2x16xf32>, vector<16x128xf32>, vector<2x128xf32> -> vector<2x128xf32>
    %cst_17 = arith.constant dense<0.000000e+00> : vector<2x128xf32>
    %33 = tpu.matmul %26, %1, %cst_17 {dimension_numbers = #tpu.dot_dimension_numbers<[1], [0], [0], [1], [0, 0, 1, 1], [], []>} : vector<2x32xf32>, vector<32x128xf32>, vector<2x128xf32> -> vector<2x128xf32>
    %34 = arith.addf %32, %33 : vector<2x128xf32>
    %35 = vector.broadcast %2 : vector<1x128xf32> to vector<2x128xf32>
    %36 = arith.addf %34, %35 : vector<2x128xf32>
    %37 = arith.negf %36 : vector<2x128xf32>
    %38 = math.exp %37 : vector<2x128xf32>
    %cst_18 = arith.constant 1.000000e+00 : f32
    %39 = vector.broadcast %cst_18 : f32 to vector<2x128xf32>
    %40 = arith.addf %39, %38 : vector<2x128xf32>
    %41 = arith.divf %39, %40 : vector<2x128xf32>
    %42 = math.tanh %36 : vector<2x128xf32>
    %43 = vector.extract_strided_slice %41 {offsets = [0, 0], sizes = [2, 32], strides = [1, 1]} : vector<2x128xf32> to vector<2x32xf32>
    %44 = vector.extract_strided_slice %41 {offsets = [0, 32], sizes = [2, 32], strides = [1, 1]} : vector<2x128xf32> to vector<2x32xf32>
    %45 = vector.extract_strided_slice %41 {offsets = [0, 64], sizes = [2, 32], strides = [1, 1]} : vector<2x128xf32> to vector<2x32xf32>
    %46 = vector.extract_strided_slice %42 {offsets = [0, 96], sizes = [2, 32], strides = [1, 1]} : vector<2x128xf32> to vector<2x32xf32>
    %47 = arith.mulf %43, %24 : vector<2x32xf32>
    %48 = arith.mulf %44, %46 : vector<2x32xf32>
    %49 = arith.addf %47, %48 : vector<2x32xf32>
    %50 = math.tanh %49 : vector<2x32xf32>
    %51 = arith.mulf %45, %50 : vector<2x32xf32>
    %c0_19 = arith.constant 0 : index
    %c6 = arith.constant 6 : index
    %c0_20 = arith.constant 0 : index
    %52 = vector.load %arg4[%c0_19, %c6, %c0_20] : memref<2x8x32xf32, #tpu.memory_space<vmem>>, vector<2x1x32xf32>
    %53 = vector.shape_cast %52 : vector<2x1x32xf32> to vector<2x32xf32>
    %54 = vector.shape_cast %51 : vector<2x32xf32> to vector<2x1x32xf32>
    tpu.vector_store %arg4[%c0_19, %c6, %c0_20], %54 {strides = array<i32>} : memref<2x8x32xf32, #tpu.memory_space<vmem>>, vector<2x1x32xf32>,
    %c0_21 = arith.constant 0 : index
    %c2 = arith.constant 2 : index
    %c0_22 = arith.constant 0 : index
    %55 = vector.load %arg0[%c0_21, %c2, %c0_22] : memref<2x8x16xf32, #tpu.memory_space<vmem>>, vector<2x1x16xf32>
    %56 = vector.shape_cast %55 : vector<2x1x16xf32> to vector<2x16xf32>
    %cst_23 = arith.constant dense<0.000000e+00> : vector<2x128xf32>
    %57 = tpu.matmul %56, %0, %cst_23 {dimension_numbers = #tpu.dot_dimension_numbers<[1], [0], [0], [1], [0, 0, 1, 1], [], []>} : vector<2x16xf32>, vector<16x128xf32>, vector<2x128xf32> -> vector<2x128xf32>
    %cst_24 = arith.constant dense<0.000000e+00> : vector<2x128xf32>
    %58 = tpu.matmul %51, %1, %cst_24 {dimension_numbers = #tpu.dot_dimension_numbers<[1], [0], [0], [1], [0, 0, 1, 1], [], []>} : vector<2x32xf32>, vector<32x128xf32>, vector<2x128xf32> -> vector<2x128xf32>
    %59 = arith.addf %57, %58 : vector<2x128xf32>
    %60 = vector.broadcast %2 : vector<1x128xf32> to vector<2x128xf32>
    %61 = arith.addf %59, %60 : vector<2x128xf32>
    %62 = arith.negf %61 : vector<2x128xf32>
    %63 = math.exp %62 : vector<2x128xf32>
    %cst_25 = arith.constant 1.000000e+00 : f32
    %64 = vector.broadcast %cst_25 : f32 to vector<2x128xf32>
    %65 = arith.addf %64, %63 : vector<2x128xf32>
    %66 = arith.divf %64, %65 : vector<2x128xf32>
    %67 = math.tanh %61 : vector<2x128xf32>
    %68 = vector.extract_strided_slice %66 {offsets = [0, 0], sizes = [2, 32], strides = [1, 1]} : vector<2x128xf32> to vector<2x32xf32>
    %69 = vector.extract_strided_slice %66 {offsets = [0, 32], sizes = [2, 32], strides = [1, 1]} : vector<2x128xf32> to vector<2x32xf32>
    %70 = vector.extract_strided_slice %66 {offsets = [0, 64], sizes = [2, 32], strides = [1, 1]} : vector<2x128xf32> to vector<2x32xf32>
    %71 = vector.extract_strided_slice %67 {offsets = [0, 96], sizes = [2, 32], strides = [1, 1]} : vector<2x128xf32> to vector<2x32xf32>
    %72 = arith.mulf %68, %49 : vector<2x32xf32>
    %73 = arith.mulf %69, %71 : vector<2x32xf32>
    %74 = arith.addf %72, %73 : vector<2x32xf32>
    %75 = math.tanh %74 : vector<2x32xf32>
    %76 = arith.mulf %70, %75 : vector<2x32xf32>
    %c0_26 = arith.constant 0 : index
    %c5 = arith.constant 5 : index
    %c0_27 = arith.constant 0 : index
    %77 = vector.load %arg4[%c0_26, %c5, %c0_27] : memref<2x8x32xf32, #tpu.memory_space<vmem>>, vector<2x1x32xf32>
    %78 = vector.shape_cast %77 : vector<2x1x32xf32> to vector<2x32xf32>
    %79 = vector.shape_cast %76 : vector<2x32xf32> to vector<2x1x32xf32>
    tpu.vector_store %arg4[%c0_26, %c5, %c0_27], %79 {strides = array<i32>} : memref<2x8x32xf32, #tpu.memory_space<vmem>>, vector<2x1x32xf32>,
    %c0_28 = arith.constant 0 : index
    %c3 = arith.constant 3 : index
    %c0_29 = arith.constant 0 : index
    %80 = vector.load %arg0[%c0_28, %c3, %c0_29] : memref<2x8x16xf32, #tpu.memory_space<vmem>>, vector<2x1x16xf32>
    %81 = vector.shape_cast %80 : vector<2x1x16xf32> to vector<2x16xf32>
    %cst_30 = arith.constant dense<0.000000e+00> : vector<2x128xf32>
    %82 = tpu.matmul %81, %0, %cst_30 {dimension_numbers = #tpu.dot_dimension_numbers<[1], [0], [0], [1], [0, 0, 1, 1], [], []>} : vector<2x16xf32>, vector<16x128xf32>, vector<2x128xf32> -> vector<2x128xf32>
    %cst_31 = arith.constant dense<0.000000e+00> : vector<2x128xf32>
    %83 = tpu.matmul %76, %1, %cst_31 {dimension_numbers = #tpu.dot_dimension_numbers<[1], [0], [0], [1], [0, 0, 1, 1], [], []>} : vector<2x32xf32>, vector<32x128xf32>, vector<2x128xf32> -> vector<2x128xf32>
    %84 = arith.addf %82, %83 : vector<2x128xf32>
    %85 = vector.broadcast %2 : vector<1x128xf32> to vector<2x128xf32>
    %86 = arith.addf %84, %85 : vector<2x128xf32>
    %87 = arith.negf %86 : vector<2x128xf32>
    %88 = math.exp %87 : vector<2x128xf32>
    %cst_32 = arith.constant 1.000000e+00 : f32
    %89 = vector.broadcast %cst_32 : f32 to vector<2x128xf32>
    %90 = arith.addf %89, %88 : vector<2x128xf32>
    %91 = arith.divf %89, %90 : vector<2x128xf32>
    %92 = math.tanh %86 : vector<2x128xf32>
    %93 = vector.extract_strided_slice %91 {offsets = [0, 0], sizes = [2, 32], strides = [1, 1]} : vector<2x128xf32> to vector<2x32xf32>
    %94 = vector.extract_strided_slice %91 {offsets = [0, 32], sizes = [2, 32], strides = [1, 1]} : vector<2x128xf32> to vector<2x32xf32>
    %95 = vector.extract_strided_slice %91 {offsets = [0, 64], sizes = [2, 32], strides = [1, 1]} : vector<2x128xf32> to vector<2x32xf32>
    %96 = vector.extract_strided_slice %92 {offsets = [0, 96], sizes = [2, 32], strides = [1, 1]} : vector<2x128xf32> to vector<2x32xf32>
    %97 = arith.mulf %93, %74 : vector<2x32xf32>
    %98 = arith.mulf %94, %96 : vector<2x32xf32>
    %99 = arith.addf %97, %98 : vector<2x32xf32>
    %100 = math.tanh %99 : vector<2x32xf32>
    %101 = arith.mulf %95, %100 : vector<2x32xf32>
    %c0_33 = arith.constant 0 : index
    %c4 = arith.constant 4 : index
    %c0_34 = arith.constant 0 : index
    %102 = vector.load %arg4[%c0_33, %c4, %c0_34] : memref<2x8x32xf32, #tpu.memory_space<vmem>>, vector<2x1x32xf32>
    %103 = vector.shape_cast %102 : vector<2x1x32xf32> to vector<2x32xf32>
    %104 = vector.shape_cast %101 : vector<2x32xf32> to vector<2x1x32xf32>
    tpu.vector_store %arg4[%c0_33, %c4, %c0_34], %104 {strides = array<i32>} : memref<2x8x32xf32, #tpu.memory_space<vmem>>, vector<2x1x32xf32>,
    %c0_35 = arith.constant 0 : index
    %c4_36 = arith.constant 4 : index
    %c0_37 = arith.constant 0 : index
    %105 = vector.load %arg0[%c0_35, %c4_36, %c0_37] : memref<2x8x16xf32, #tpu.memory_space<vmem>>, vector<2x1x16xf32>
    %106 = vector.shape_cast %105 : vector<2x1x16xf32> to vector<2x16xf32>
    %cst_38 = arith.constant dense<0.000000e+00> : vector<2x128xf32>
    %107 = tpu.matmul %106, %0, %cst_38 {dimension_numbers = #tpu.dot_dimension_numbers<[1], [0], [0], [1], [0, 0, 1, 1], [], []>} : vector<2x16xf32>, vector<16x128xf32>, vector<2x128xf32> -> vector<2x128xf32>
    %cst_39 = arith.constant dense<0.000000e+00> : vector<2x128xf32>
    %108 = tpu.matmul %101, %1, %cst_39 {dimension_numbers = #tpu.dot_dimension_numbers<[1], [0], [0], [1], [0, 0, 1, 1], [], []>} : vector<2x32xf32>, vector<32x128xf32>, vector<2x128xf32> -> vector<2x128xf32>
    %109 = arith.addf %107, %108 : vector<2x128xf32>
    %110 = vector.broadcast %2 : vector<1x128xf32> to vector<2x128xf32>
    %111 = arith.addf %109, %110 : vector<2x128xf32>
    %112 = arith.negf %111 : vector<2x128xf32>
    %113 = math.exp %112 : vector<2x128xf32>
    %cst_40 = arith.constant 1.000000e+00 : f32
    %114 = vector.broadcast %cst_40 : f32 to vector<2x128xf32>
    %115 = arith.addf %114, %113 : vector<2x128xf32>
    %116 = arith.divf %114, %115 : vector<2x128xf32>
    %117 = math.tanh %111 : vector<2x128xf32>
    %118 = vector.extract_strided_slice %116 {offsets = [0, 0], sizes = [2, 32], strides = [1, 1]} : vector<2x128xf32> to vector<2x32xf32>
    %119 = vector.extract_strided_slice %116 {offsets = [0, 32], sizes = [2, 32], strides = [1, 1]} : vector<2x128xf32> to vector<2x32xf32>
    %120 = vector.extract_strided_slice %116 {offsets = [0, 64], sizes = [2, 32], strides = [1, 1]} : vector<2x128xf32> to vector<2x32xf32>
    %121 = vector.extract_strided_slice %117 {offsets = [0, 96], sizes = [2, 32], strides = [1, 1]} : vector<2x128xf32> to vector<2x32xf32>
    %122 = arith.mulf %118, %99 : vector<2x32xf32>
    %123 = arith.mulf %119, %121 : vector<2x32xf32>
    %124 = arith.addf %122, %123 : vector<2x32xf32>
    %125 = math.tanh %124 : vector<2x32xf32>
    %126 = arith.mulf %120, %125 : vector<2x32xf32>
    %c0_41 = arith.constant 0 : index
    %c3_42 = arith.constant 3 : index
    %c0_43 = arith.constant 0 : index
    %127 = vector.load %arg4[%c0_41, %c3_42, %c0_43] : memref<2x8x32xf32, #tpu.memory_space<vmem>>, vector<2x1x32xf32>
    %128 = vector.shape_cast %127 : vector<2x1x32xf32> to vector<2x32xf32>
    %129 = vector.shape_cast %126 : vector<2x32xf32> to vector<2x1x32xf32>
    tpu.vector_store %arg4[%c0_41, %c3_42, %c0_43], %129 {strides = array<i32>} : memref<2x8x32xf32, #tpu.memory_space<vmem>>, vector<2x1x32xf32>,
    %c0_44 = arith.constant 0 : index
    %c5_45 = arith.constant 5 : index
    %c0_46 = arith.constant 0 : index
    %130 = vector.load %arg0[%c0_44, %c5_45, %c0_46] : memref<2x8x16xf32, #tpu.memory_space<vmem>>, vector<2x1x16xf32>
    %131 = vector.shape_cast %130 : vector<2x1x16xf32> to vector<2x16xf32>
    %cst_47 = arith.constant dense<0.000000e+00> : vector<2x128xf32>
    %132 = tpu.matmul %131, %0, %cst_47 {dimension_numbers = #tpu.dot_dimension_numbers<[1], [0], [0], [1], [0, 0, 1, 1], [], []>} : vector<2x16xf32>, vector<16x128xf32>, vector<2x128xf32> -> vector<2x128xf32>
    %cst_48 = arith.constant dense<0.000000e+00> : vector<2x128xf32>
    %133 = tpu.matmul %126, %1, %cst_48 {dimension_numbers = #tpu.dot_dimension_numbers<[1], [0], [0], [1], [0, 0, 1, 1], [], []>} : vector<2x32xf32>, vector<32x128xf32>, vector<2x128xf32> -> vector<2x128xf32>
    %134 = arith.addf %132, %133 : vector<2x128xf32>
    %135 = vector.broadcast %2 : vector<1x128xf32> to vector<2x128xf32>
    %136 = arith.addf %134, %135 : vector<2x128xf32>
    %137 = arith.negf %136 : vector<2x128xf32>
    %138 = math.exp %137 : vector<2x128xf32>
    %cst_49 = arith.constant 1.000000e+00 : f32
    %139 = vector.broadcast %cst_49 : f32 to vector<2x128xf32>
    %140 = arith.addf %139, %138 : vector<2x128xf32>
    %141 = arith.divf %139, %140 : vector<2x128xf32>
    %142 = math.tanh %136 : vector<2x128xf32>
    %143 = vector.extract_strided_slice %141 {offsets = [0, 0], sizes = [2, 32], strides = [1, 1]} : vector<2x128xf32> to vector<2x32xf32>
    %144 = vector.extract_strided_slice %141 {offsets = [0, 32], sizes = [2, 32], strides = [1, 1]} : vector<2x128xf32> to vector<2x32xf32>
    %145 = vector.extract_strided_slice %141 {offsets = [0, 64], sizes = [2, 32], strides = [1, 1]} : vector<2x128xf32> to vector<2x32xf32>
    %146 = vector.extract_strided_slice %142 {offsets = [0, 96], sizes = [2, 32], strides = [1, 1]} : vector<2x128xf32> to vector<2x32xf32>
    %147 = arith.mulf %143, %124 : vector<2x32xf32>
    %148 = arith.mulf %144, %146 : vector<2x32xf32>
    %149 = arith.addf %147, %148 : vector<2x32xf32>
    %150 = math.tanh %149 : vector<2x32xf32>
    %151 = arith.mulf %145, %150 : vector<2x32xf32>
    %c0_50 = arith.constant 0 : index
    %c2_51 = arith.constant 2 : index
    %c0_52 = arith.constant 0 : index
    %152 = vector.load %arg4[%c0_50, %c2_51, %c0_52] : memref<2x8x32xf32, #tpu.memory_space<vmem>>, vector<2x1x32xf32>
    %153 = vector.shape_cast %152 : vector<2x1x32xf32> to vector<2x32xf32>
    %154 = vector.shape_cast %151 : vector<2x32xf32> to vector<2x1x32xf32>
    tpu.vector_store %arg4[%c0_50, %c2_51, %c0_52], %154 {strides = array<i32>} : memref<2x8x32xf32, #tpu.memory_space<vmem>>, vector<2x1x32xf32>,
    %c0_53 = arith.constant 0 : index
    %c6_54 = arith.constant 6 : index
    %c0_55 = arith.constant 0 : index
    %155 = vector.load %arg0[%c0_53, %c6_54, %c0_55] : memref<2x8x16xf32, #tpu.memory_space<vmem>>, vector<2x1x16xf32>
    %156 = vector.shape_cast %155 : vector<2x1x16xf32> to vector<2x16xf32>
    %cst_56 = arith.constant dense<0.000000e+00> : vector<2x128xf32>
    %157 = tpu.matmul %156, %0, %cst_56 {dimension_numbers = #tpu.dot_dimension_numbers<[1], [0], [0], [1], [0, 0, 1, 1], [], []>} : vector<2x16xf32>, vector<16x128xf32>, vector<2x128xf32> -> vector<2x128xf32>
    %cst_57 = arith.constant dense<0.000000e+00> : vector<2x128xf32>
    %158 = tpu.matmul %151, %1, %cst_57 {dimension_numbers = #tpu.dot_dimension_numbers<[1], [0], [0], [1], [0, 0, 1, 1], [], []>} : vector<2x32xf32>, vector<32x128xf32>, vector<2x128xf32> -> vector<2x128xf32>
    %159 = arith.addf %157, %158 : vector<2x128xf32>
    %160 = vector.broadcast %2 : vector<1x128xf32> to vector<2x128xf32>
    %161 = arith.addf %159, %160 : vector<2x128xf32>
    %162 = arith.negf %161 : vector<2x128xf32>
    %163 = math.exp %162 : vector<2x128xf32>
    %cst_58 = arith.constant 1.000000e+00 : f32
    %164 = vector.broadcast %cst_58 : f32 to vector<2x128xf32>
    %165 = arith.addf %164, %163 : vector<2x128xf32>
    %166 = arith.divf %164, %165 : vector<2x128xf32>
    %167 = math.tanh %161 : vector<2x128xf32>
    %168 = vector.extract_strided_slice %166 {offsets = [0, 0], sizes = [2, 32], strides = [1, 1]} : vector<2x128xf32> to vector<2x32xf32>
    %169 = vector.extract_strided_slice %166 {offsets = [0, 32], sizes = [2, 32], strides = [1, 1]} : vector<2x128xf32> to vector<2x32xf32>
    %170 = vector.extract_strided_slice %166 {offsets = [0, 64], sizes = [2, 32], strides = [1, 1]} : vector<2x128xf32> to vector<2x32xf32>
    %171 = vector.extract_strided_slice %167 {offsets = [0, 96], sizes = [2, 32], strides = [1, 1]} : vector<2x128xf32> to vector<2x32xf32>
    %172 = arith.mulf %168, %149 : vector<2x32xf32>
    %173 = arith.mulf %169, %171 : vector<2x32xf32>
    %174 = arith.addf %172, %173 : vector<2x32xf32>
    %175 = math.tanh %174 : vector<2x32xf32>
    %176 = arith.mulf %170, %175 : vector<2x32xf32>
    %c0_59 = arith.constant 0 : index
    %c1_60 = arith.constant 1 : index
    %c0_61 = arith.constant 0 : index
    %177 = vector.load %arg4[%c0_59, %c1_60, %c0_61] : memref<2x8x32xf32, #tpu.memory_space<vmem>>, vector<2x1x32xf32>
    %178 = vector.shape_cast %177 : vector<2x1x32xf32> to vector<2x32xf32>
    %179 = vector.shape_cast %176 : vector<2x32xf32> to vector<2x1x32xf32>
    tpu.vector_store %arg4[%c0_59, %c1_60, %c0_61], %179 {strides = array<i32>} : memref<2x8x32xf32, #tpu.memory_space<vmem>>, vector<2x1x32xf32>,
    %c0_62 = arith.constant 0 : index
    %c7_63 = arith.constant 7 : index
    %c0_64 = arith.constant 0 : index
    %180 = vector.load %arg0[%c0_62, %c7_63, %c0_64] : memref<2x8x16xf32, #tpu.memory_space<vmem>>, vector<2x1x16xf32>
    %181 = vector.shape_cast %180 : vector<2x1x16xf32> to vector<2x16xf32>
    %cst_65 = arith.constant dense<0.000000e+00> : vector<2x128xf32>
    %182 = tpu.matmul %181, %0, %cst_65 {dimension_numbers = #tpu.dot_dimension_numbers<[1], [0], [0], [1], [0, 0, 1, 1], [], []>} : vector<2x16xf32>, vector<16x128xf32>, vector<2x128xf32> -> vector<2x128xf32>
    %cst_66 = arith.constant dense<0.000000e+00> : vector<2x128xf32>
    %183 = tpu.matmul %176, %1, %cst_66 {dimension_numbers = #tpu.dot_dimension_numbers<[1], [0], [0], [1], [0, 0, 1, 1], [], []>} : vector<2x32xf32>, vector<32x128xf32>, vector<2x128xf32> -> vector<2x128xf32>
    %184 = arith.addf %182, %183 : vector<2x128xf32>
    %185 = vector.broadcast %2 : vector<1x128xf32> to vector<2x128xf32>
    %186 = arith.addf %184, %185 : vector<2x128xf32>
    %187 = arith.negf %186 : vector<2x128xf32>
    %188 = math.exp %187 : vector<2x128xf32>
    %cst_67 = arith.constant 1.000000e+00 : f32
    %189 = vector.broadcast %cst_67 : f32 to vector<2x128xf32>
    %190 = arith.addf %189, %188 : vector<2x128xf32>
    %191 = arith.divf %189, %190 : vector<2x128xf32>
    %192 = math.tanh %186 : vector<2x128xf32>
    %193 = vector.extract_strided_slice %191 {offsets = [0, 0], sizes = [2, 32], strides = [1, 1]} : vector<2x128xf32> to vector<2x32xf32>
    %194 = vector.extract_strided_slice %191 {offsets = [0, 32], sizes = [2, 32], strides = [1, 1]} : vector<2x128xf32> to vector<2x32xf32>
    %195 = vector.extract_strided_slice %191 {offsets = [0, 64], sizes = [2, 32], strides = [1, 1]} : vector<2x128xf32> to vector<2x32xf32>
    %196 = vector.extract_strided_slice %192 {offsets = [0, 96], sizes = [2, 32], strides = [1, 1]} : vector<2x128xf32> to vector<2x32xf32>
    %197 = arith.mulf %193, %174 : vector<2x32xf32>
    %198 = arith.mulf %194, %196 : vector<2x32xf32>
    %199 = arith.addf %197, %198 : vector<2x32xf32>
    %200 = math.tanh %199 : vector<2x32xf32>
    %201 = arith.mulf %195, %200 : vector<2x32xf32>
    %c0_68 = arith.constant 0 : index
    %c0_69 = arith.constant 0 : index
    %c0_70 = arith.constant 0 : index
    %202 = vector.load %arg4[%c0_68, %c0_69, %c0_70] : memref<2x8x32xf32, #tpu.memory_space<vmem>>, vector<2x1x32xf32>
    %203 = vector.shape_cast %202 : vector<2x1x32xf32> to vector<2x32xf32>
    %204 = vector.shape_cast %201 : vector<2x32xf32> to vector<2x1x32xf32>
    tpu.vector_store %arg4[%c0_68, %c0_69, %c0_70], %204 {strides = array<i32>} : memref<2x8x32xf32, #tpu.memory_space<vmem>>, vector<2x1x32xf32>,
    return
  }
}

</mosaic_0001>

<llo_original>
// kernel: my_lstm_forward.1
$region0: #{my_lstm_forward.1}
  #allocation0 [shape = 'u32[]', space=smem, size = 0x4, offset = 0x4, fixed_abs, tag = 'smem constant byte address 0x4 - core index']
  #allocation1 [shape = 'u32[144,128]{1,0:T(1,128)}', space=vmem, size = 0x12000, scoped, tag = 'internal scratch']
  %s0 = inlined_call_operand.hbm [shape: f32[2,8,16], index: 0, kind: input, shape index: {}]
  %s1 = inlined_call_operand.hbm [shape: f32[16,128], index: 1, kind: input, shape index: {}]
  %s2 = inlined_call_operand.hbm [shape: f32[32,128], index: 2, kind: input, shape index: {}]
  %s3 = inlined_call_operand.vmem [shape: f32[1,128], index: 3, kind: input, shape index: {}]
  %s4 = inlined_call_operand.hbm [shape: f32[2,8,32], index: 4, kind: output, shape index: {}]
  %s5 = sld [smem:[#allocation0]]
  $region38: #{my_lstm_forward.1} parent=0
    _
  %s7 = ssub.s32 1, %s5
  %s8 = scalar_select 0, %s7, %s5
  $region1: #{my_lstm_forward.1} parent=0
    #allocation2 [shape = 'u8[8192]{0}', space=vmem, size = 0x2000, scoped, tag = 'input window, operand 0, single buffered']
    #allocation3 [shape = 's32[1]{0}', space=sflag, size = 0x4, scoped, tag = 'scoped memory for my_lstm_forward.1']
    #allocation4 [shape = 's32[1]{0}', space=sflag, size = 0x4, scoped, tag = 'scoped memory for my_lstm_forward.1']
    #allocation5 [shape = 'u8[8192]{0}', space=vmem, size = 0x2000, scoped, tag = 'input window, operand 1, single buffered']
    #allocation6 [shape = 's32[1]{0}', space=sflag, size = 0x4, scoped, tag = 'scoped memory for my_lstm_forward.1']
    #allocation7 [shape = 'u8[16384]{0}', space=vmem, size = 0x4000, scoped, tag = 'input window, operand 2, single buffered']
    #allocation8 [shape = 'u8[8192]{0}', space=vmem, size = 0x2000, scoped, tag = 'output window, operand 0, single buffered']
    %9 = vsyncpa [#allocation3], 0
    %10 = vsyncpa [#allocation6], 0
    %11 = vsyncpa [#allocation4], 0
    // Predicated region
    $region2: #{my_lstm_forward.1} parent=1 // pred_check
      _
    $region3: #{my_lstm_forward.1} parent=1 // pred_check_branch
      %13 = sbr.rel (0) target = $region5
    $region4: #{my_lstm_forward.1} parent=1 // pred_region
      %s15 = ssub.s32 256, 256
      %16 = vsyncadd [#allocation3], %s15
      %s17 = sshll.u32 [#allocation2], 4
      %s18 = int_to_ptr.vmem [resolvable:$true] %s17
      %23 = dma.hbm_to_vmem [thread:$0]  %s0, 256, %s18, [#allocation3], 128, 128, 8
    $region5: #{my_lstm_forward.1} parent=1 // pred_fallthru
      _
    // Predicated region
    $region6: #{my_lstm_forward.1} parent=1 // pred_check
      _
    $region7: #{my_lstm_forward.1} parent=1 // pred_check_branch
      %25 = sbr.rel (0) target = $region9
    $region8: #{my_lstm_forward.1} parent=1 // pred_region
      %s27 = ssub.s32 256, 256
      %28 = vsyncadd [#allocation6], %s27
      %s29 = sshll.u32 [#allocation5], 4
      %s30 = int_to_ptr.vmem [resolvable:$true] %s29
      %35 = dma.hbm_to_vmem [thread:$0]  %s1, 256, %s30, [#allocation6], 128, 128, 8
    $region9: #{my_lstm_forward.1} parent=1 // pred_fallthru
      _
    // Predicated region
    $region10: #{my_lstm_forward.1} parent=1 // pred_check
      _
    $region11: #{my_lstm_forward.1} parent=1 // pred_check_branch
      %37 = sbr.rel (0) target = $region13
    $region12: #{my_lstm_forward.1} parent=1 // pred_region
      %s39 = ssub.s32 512, 512
      %40 = vsyncadd [#allocation6], %s39
      %s41 = sshll.u32 [#allocation7], 4
      %s42 = int_to_ptr.vmem [resolvable:$true] %s41
      %47 = dma.hbm_to_vmem [thread:$0]  %s2, 512, %s42, [#allocation6], 128, 128, 8
    $region13: #{my_lstm_forward.1} parent=1 // pred_fallthru
      _
    // Predicated region
    $region14: #{my_lstm_forward.1} parent=1 // pred_check
      _
    $region15: #{my_lstm_forward.1} parent=1 // pred_check_branch
      %49 = sbr.rel (0) target = $region17
    $region16: #{my_lstm_forward.1} parent=1 // pred_region
      _
    $region17: #{my_lstm_forward.1} parent=1 // pred_fallthru
      _
    // Predicated region
    $region18: #{my_lstm_forward.1} parent=1 // pred_check
      _
    $region19: #{my_lstm_forward.1} parent=1 // pred_check_branch
      %51 = sbr.rel (0) target = $region21
    $region20: #{my_lstm_forward.1} parent=1 // pred_region
      %52 = dma.done [#allocation3], 256
    $region21: #{my_lstm_forward.1} parent=1 // pred_fallthru
      _
    // Predicated region
    $region22: #{my_lstm_forward.1} parent=1 // pred_check
      _
    $region23: #{my_lstm_forward.1} parent=1 // pred_check_branch
      %54 = sbr.rel (0) target = $region25
    $region24: #{my_lstm_forward.1} parent=1 // pred_region
      %55 = dma.done [#allocation6], 256
    $region25: #{my_lstm_forward.1} parent=1 // pred_fallthru
      _
    // Predicated region
    $region26: #{my_lstm_forward.1} parent=1 // pred_check
      _
    $region27: #{my_lstm_forward.1} parent=1 // pred_check_branch
      %57 = sbr.rel (0) target = $region29
    $region28: #{my_lstm_forward.1} parent=1 // pred_region
      %58 = dma.done [#allocation6], 512
    $region29: #{my_lstm_forward.1} parent=1 // pred_fallthru
      _
    %v59 = vld [vmem:[#allocation5] sm:$0xff]
    %v60 = vld [vmem:[#allocation5 + $0x8] sm:$0xff]
    %v61 = vld [vmem:[#allocation7] sm:$0xff]
    %v62 = vld [vmem:[#allocation7 + $0x8] sm:$0xff]
    %v63 = vld [vmem:[#allocation7 + $0x10] sm:$0xff]
    %v64 = vld [vmem:[#allocation7 + $0x18] sm:$0xff]
    %v65 = vld [vmem:[%s3] sm:$0x1]
    %v66 = vld [vmem:[#allocation2] sm:$0x1]
    %v67 = vld [vmem:[#allocation2 + $0x8] sm:$0x1]
    %vm68 = vcmask 261120
    %v70 = vsel %vm68, 0.0, 0
    %72 = vmatprep.subr.mxu0 0.0
    %73 = vmatpush1.msra.mxu0 %v61
    %74 = vmatprep.subr.mxu0 0.0
    %75 = vmatpush1.msra.mxu0 %v62
    %76 = vmatprep.subr.mxu0 0.0
    %77 = vmatpush1.msra.mxu0 %v63
    %78 = vmatprep.subr.mxu0 0.0
    %79 = vmatpush1.msra.mxu0 %v64
    %80 = vmatprep.subr.mxu0 0.0
    %81 = vmatpush1.msra.mxu0 0.0
    %82 = vmatprep.subr.mxu0 0.0
    %83 = vmatpush1.msra.mxu0 0.0
    %84 = vmatprep.subr.mxu0 0.0
    %85 = vmatpush1.msra.mxu0 0.0
    %86 = vmatprep.subr.mxu0 0.0
    %87 = vmatpush1.msra.mxu0 0.0
    %88 = vmatprep.subr.mxu0 0.0
    %89 = vmatpush1.msra.mxu0 0.0
    %90 = vmatprep.subr.mxu0 0.0
    %91 = vmatpush1.msra.mxu0 0.0
    %92 = vmatprep.subr.mxu0 0.0
    %93 = vmatpush1.msra.mxu0 0.0
    %94 = vmatprep.subr.mxu0 0.0
    %95 = vmatpush1.msra.mxu0 0.0
    %96 = vmatprep.subr.mxu0 0.0
    %97 = vmatpush1.msra.mxu0 0.0
    %98 = vmatprep.subr.mxu0 0.0
    %99 = vmatpush1.msra.mxu0 0.0
    %100 = vmatprep.subr.mxu0 0.0
    %101 = vmatpush1.msra.mxu0 0.0
    %102 = vmatprep.subr.mxu0 0.0
    %103 = vmatpush1.msra.mxu0 0.0
    %104 = vmatprep.subr.mxu0 0.0
    %105 = vmatpush1.msra.mxu0 0.0
    %106 = vmatprep.subr.mxu0 0.0
    %107 = vmatpush1.msra.mxu0 0.0
    %108 = vmatprep.subr.mxu0 0.0
    %109 = vmatpush1.msra.mxu0 0.0
    %110 = vmatprep.subr.mxu0 0.0
    %111 = vmatpush1.msra.mxu0 0.0
    %112 = vmatprep.subr.mxu0 0.0
    %113 = vmatpush1.msra.mxu0 0.0
    %114 = vmatprep.subr.mxu0 0.0
    %115 = vmatpush1.msra.mxu0 0.0
    %116 = vmatprep.subr.mxu0 0.0
    %117 = vmatpush1.msra.mxu0 0.0
    %118 = vmatprep.subr.mxu0 0.0
    %119 = vmatpush1.msra.mxu0 0.0
    %120 = vmatprep.subr.mxu0 0.0
    %121 = vmatpush1.msra.mxu0 0.0
    %122 = vmatprep.subr.mxu0 0.0
    %123 = vmatpush1.msra.mxu0 0.0
    %124 = vmatprep.subr.mxu0 0.0
    %125 = vmatpush1.msra.mxu0 0.0
    %126 = vmatprep.subr.mxu0 0.0
    %127 = vmatpush1.msra.mxu0 0.0
    %128 = vmatprep.subr.mxu0 0.0
    %129 = vmatpush1.msra.mxu0 0.0
    %130 = vmatprep.subr.mxu0 0.0
    %131 = vmatpush1.msra.mxu0 0.0
    %132 = vmatprep.subr.mxu0 0.0
    %133 = vmatpush1.msra.mxu0 0.0
    %134 = vmatprep.subr.mxu0 0.0
    %135 = vmatpush1.msra.mxu0 0.0
    %136 = vmatprep.mubr.f32.mxu0 0.0
    %137 = vmatmul.mubr.f32.gmra.mrb[0].mxu0 %v70
    %v138 = vpop.f32.mrb[0].mxu0
    %v139 = vadd.f32 0.0, %v138
    %v140 = vpop.f32.mrb[0].mxu0
    %141 = vdwg.mxu0
    %v144 = vrot.slane %v67, 7
    %vm145 = vcmask 1041409
    %v146 = vsel %vm145, %v144, %v66
    %vm147 = vcmask 130048
    %v148 = vsel %vm147, %v146, 0
    %150 = vmatprep.subr.mxu0 0.0
    %151 = vmatpush1.msra.mxu0 %v59
    %152 = vmatprep.subr.mxu0 0.0
    %153 = vmatpush1.msra.mxu0 %v60
    %154 = vmatprep.subr.mxu0 0.0
    %155 = vmatpush1.msra.mxu0 0.0
    %156 = vmatprep.subr.mxu0 0.0
    %157 = vmatpush1.msra.mxu0 0.0
    %158 = vmatprep.subr.mxu0 0.0
    %159 = vmatpush1.msra.mxu0 0.0
    %160 = vmatprep.subr.mxu0 0.0
    %161 = vmatpush1.msra.mxu0 0.0
    %162 = vmatprep.subr.mxu0 0.0
    %163 = vmatpush1.msra.mxu0 0.0
    %164 = vmatprep.subr.mxu0 0.0
    %165 = vmatpush1.msra.mxu0 0.0
    %166 = vmatprep.subr.mxu0 0.0
    %167 = vmatpush1.msra.mxu0 0.0
    %168 = vmatprep.subr.mxu0 0.0
    %169 = vmatpush1.msra.mxu0 0.0
    %170 = vmatprep.subr.mxu0 0.0
    %171 = vmatpush1.msra.mxu0 0.0
    %172 = vmatprep.subr.mxu0 0.0
    %173 = vmatpush1.msra.mxu0 0.0
    %174 = vmatprep.subr.mxu0 0.0
    %175 = vmatpush1.msra.mxu0 0.0
    %176 = vmatprep.subr.mxu0 0.0
    %177 = vmatpush1.msra.mxu0 0.0
    %178 = vmatprep.subr.mxu0 0.0
    %179 = vmatpush1.msra.mxu0 0.0
    %180 = vmatprep.subr.mxu0 0.0
    %181 = vmatpush1.msra.mxu0 0.0
    %182 = vmatprep.subr.mxu0 0.0
    %183 = vmatpush1.msra.mxu0 0.0
    %184 = vmatprep.subr.mxu0 0.0
    %185 = vmatpush1.msra.mxu0 0.0
    %186 = vmatprep.subr.mxu0 0.0
    %187 = vmatpush1.msra.mxu0 0.0
    %188 = vmatprep.subr.mxu0 0.0
    %189 = vmatpush1.msra.mxu0 0.0
    %190 = vmatprep.subr.mxu0 0.0
    %191 = vmatpush1.msra.mxu0 0.0
    %192 = vmatprep.subr.mxu0 0.0
    %193 = vmatpush1.msra.mxu0 0.0
    %194 = vmatprep.subr.mxu0 0.0
    %195 = vmatpush1.msra.mxu0 0.0
    %196 = vmatprep.subr.mxu0 0.0
    %197 = vmatpush1.msra.mxu0 0.0
    %198 = vmatprep.subr.mxu0 0.0
    %199 = vmatpush1.msra.mxu0 0.0
    %200 = vmatprep.subr.mxu0 0.0
    %201 = vmatpush1.msra.mxu0 0.0
    %202 = vmatprep.subr.mxu0 0.0
    %203 = vmatpush1.msra.mxu0 0.0
    %204 = vmatprep.subr.mxu0 0.0
    %205 = vmatpush1.msra.mxu0 0.0
    %206 = vmatprep.subr.mxu0 0.0
    %207 = vmatpush1.msra.mxu0 0.0
    %208 = vmatprep.subr.mxu0 0.0
    %209 = vmatpush1.msra.mxu0 0.0
    %210 = vmatprep.subr.mxu0 0.0
    %211 = vmatpush1.msra.mxu0 0.0
    %212 = vmatprep.subr.mxu0 0.0
    %213 = vmatpush1.msra.mxu0 0.0
    %214 = vmatprep.mubr.f32.mxu0 0.0
    %215 = vmatmul.mubr.f32.gmra.mrb[0].mxu0 %v148
    %v216 = vpop.f32.mrb[0].mxu0
    %v217 = vadd.f32 %v139, %v216
    %v218 = vpop.f32.mrb[0].mxu0
    %219 = vdwg.mxu0
    %v221 = vlaneseq
    %v222 = vshrl.u32 %v221, 7
    %v223 = vsub.s32 0, %v222
    %v224 = vrot.slane %v65, %v223
    %v226 = vadd.f32 %v217, %v224
    %v227 = vxor.u32 %v226, 2147483648
    %v228 = vmul.f32 %v227, 1.442695
    %v229 = vpow.pop %v228
    %v230 = vadd.f32 %v229, 1.0
    %v231 = vrcp.pop %v230
    %v232 = vmul.f32 1.0, %v231
    %v233 = vtanh.pop %v226
    %v234 = vmul.f32 %v232, 0.0
    %236 = vrot.lane.b32.xlu0 %v233, 64
    %v237 = vpop.permute.xlu0 %236
    %v239 = vmul.f32 %v232, %v237
    %241 = vrot.lane.b32.xlu0 %v239, 96
    %v242 = vpop.permute.xlu0 %241
    %v244 = vadd.f32 %v234, %v242
    %v245 = vtanh.pop %v244
    %247 = vrot.lane.b32.xlu0 %v245, 64
    %v248 = vpop.permute.xlu0 %247
    %v250 = vmul.f32 %v232, %v248
    %v253 = vunpack.c.l.s4 1966171168
    %v254 = vunpack.c.0.s8 %v253
    %v255 = vlaneseq
    %v256 = vshrl.u32 %v255, 7
    %v257 = vsub.s32 %v254, %v256
    %v258 = vrot.slane %v250, %v257
    %v259 = vcombine.high %v258, %v258
    %v261 = vunpack.c.l.s4 1966171168
    %v262 = vunpack.c.0.s8 %v261
    %v263 = vlaneseq
    %v264 = vshrl.u32 %v263, 7
    %v265 = vsub.s32 %v262, %v264
    %v266 = vrot.slane %v258, %v265
    %v268 = vunpack.c.l.s4 1966171168
    %v269 = vunpack.c.0.s8 %v268
    %v270 = vlaneseq
    %v271 = vshrl.u32 %v270, 7
    %v272 = vsub.s32 %v269, %v271
    %v273 = vrot.slane %v259, %v272
    %v274 = vlaneseq
    %v275 = vshrl.u32 %v274, 7
    %v276 = vsub.s32 0, %v275
    %v277 = vrot.slane %v266, %v276
    %v278 = vlaneseq
    %v279 = vshrl.u32 %v278, 7
    %v280 = vsub.s32 0, %v279
    %v281 = vrot.slane %v273, %v280
    %282 = vrot.lane.b32.xlu0 %v277, 64
    %v283 = vpop.permute.xlu0 %282
    %284 = vrot.lane.b32.xlu0 %v281, 64
    %v285 = vpop.permute.xlu0 %284
    %vm288 = vcmask 253952
    %289 = vst.msk [vmem:[#allocation8 + $0x7] sm:$0x1] %vm288, %v283
    %290 = vst.msk [vmem:[#allocation8 + $0xf] sm:$0x1] %vm288, %v285
    %v291 = vld [vmem:[#allocation2 + $0x1] sm:$0x1]
    %v292 = vld [vmem:[#allocation2 + $0x9] sm:$0x1]
    %293 = vrot.lane.b32.xlu0 %v250, 64
    %v294 = vpop.permute.xlu0 %293
    %v295 = vsel %vm68, %v294, 0
    %297 = vmatprep.subr.mxu0 0.0
    %298 = vmatpush1.msra.mxu0 %v61
    %299 = vmatprep.subr.mxu0 0.0
    %300 = vmatpush1.msra.mxu0 %v62
    %301 = vmatprep.subr.mxu0 0.0
    %302 = vmatpush1.msra.mxu0 %v63
    %303 = vmatprep.subr.mxu0 0.0
    %304 = vmatpush1.msra.mxu0 %v64
    %305 = vmatprep.subr.mxu0 0.0
    %306 = vmatpush1.msra.mxu0 0.0
    %307 = vmatprep.subr.mxu0 0.0
    %308 = vmatpush1.msra.mxu0 0.0
    %309 = vmatprep.subr.mxu0 0.0
    %310 = vmatpush1.msra.mxu0 0.0
    %311 = vmatprep.subr.mxu0 0.0
    %312 = vmatpush1.msra.mxu0 0.0
    %313 = vmatprep.subr.mxu0 0.0
    %314 = vmatpush1.msra.mxu0 0.0
    %315 = vmatprep.subr.mxu0 0.0
    %316 = vmatpush1.msra.mxu0 0.0
    %317 = vmatprep.subr.mxu0 0.0
    %318 = vmatpush1.msra.mxu0 0.0
    %319 = vmatprep.subr.mxu0 0.0
    %320 = vmatpush1.msra.mxu0 0.0
    %321 = vmatprep.subr.mxu0 0.0
    %322 = vmatpush1.msra.mxu0 0.0
    %323 = vmatprep.subr.mxu0 0.0
    %324 = vmatpush1.msra.mxu0 0.0
    %325 = vmatprep.subr.mxu0 0.0
    %326 = vmatpush1.msra.mxu0 0.0
    %327 = vmatprep.subr.mxu0 0.0
    %328 = vmatpush1.msra.mxu0 0.0
    %329 = vmatprep.subr.mxu0 0.0
    %330 = vmatpush1.msra.mxu0 0.0
    %331 = vmatprep.subr.mxu0 0.0
    %332 = vmatpush1.msra.mxu0 0.0
    %333 = vmatprep.subr.mxu0 0.0
    %334 = vmatpush1.msra.mxu0 0.0
    %335 = vmatprep.subr.mxu0 0.0
    %336 = vmatpush1.msra.mxu0 0.0
    %337 = vmatprep.subr.mxu0 0.0
    %338 = vmatpush1.msra.mxu0 0.0
    %339 = vmatprep.subr.mxu0 0.0
    %340 = vmatpush1.msra.mxu0 0.0
    %341 = vmatprep.subr.mxu0 0.0
    %342 = vmatpush1.msra.mxu0 0.0
    %343 = vmatprep.subr.mxu0 0.0
    %344 = vmatpush1.msra.mxu0 0.0
    %345 = vmatprep.subr.mxu0 0.0
    %346 = vmatpush1.msra.mxu0 0.0
    %347 = vmatprep.subr.mxu0 0.0
    %348 = vmatpush1.msra.mxu0 0.0
    %349 = vmatprep.subr.mxu0 0.0
    %350 = vmatpush1.msra.mxu0 0.0
    %351 = vmatprep.subr.mxu0 0.0
    %352 = vmatpush1.msra.mxu0 0.0
    %353 = vmatprep.subr.mxu0 0.0
    %354 = vmatpush1.msra.mxu0 0.0
    %355 = vmatprep.subr.mxu0 0.0
    %356 = vmatpush1.msra.mxu0 0.0
    %357 = vmatprep.subr.mxu0 0.0
    %358 = vmatpush1.msra.mxu0 0.0
    %359 = vmatprep.subr.mxu0 0.0
    %360 = vmatpush1.msra.mxu0 0.0
    %361 = vmatprep.mubr.f32.mxu0 0.0
    %362 = vmatmul.mubr.f32.gmra.mrb[0].mxu0 %v295
    %v363 = vpop.f32.mrb[0].mxu0
    %v364 = vadd.f32 0.0, %v363
    %v365 = vpop.f32.mrb[0].mxu0
    %366 = vdwg.mxu0
    %v369 = vrot.slane %v292, 7
    %v370 = vsel %vm145, %v369, %v291
    %v371 = vsel %vm147, %v370, 0
    %373 = vmatprep.subr.mxu0 0.0
    %374 = vmatpush1.msra.mxu0 %v59
    %375 = vmatprep.subr.mxu0 0.0
    %376 = vmatpush1.msra.mxu0 %v60
    %377 = vmatprep.subr.mxu0 0.0
    %378 = vmatpush1.msra.mxu0 0.0
    %379 = vmatprep.subr.mxu0 0.0
    %380 = vmatpush1.msra.mxu0 0.0
    %381 = vmatprep.subr.mxu0 0.0
    %382 = vmatpush1.msra.mxu0 0.0
    %383 = vmatprep.subr.mxu0 0.0
    %384 = vmatpush1.msra.mxu0 0.0
    %385 = vmatprep.subr.mxu0 0.0
    %386 = vmatpush1.msra.mxu0 0.0
    %387 = vmatprep.subr.mxu0 0.0
    %388 = vmatpush1.msra.mxu0 0.0
    %389 = vmatprep.subr.mxu0 0.0
    %390 = vmatpush1.msra.mxu0 0.0
    %391 = vmatprep.subr.mxu0 0.0
    %392 = vmatpush1.msra.mxu0 0.0
    %393 = vmatprep.subr.mxu0 0.0
    %394 = vmatpush1.msra.mxu0 0.0
    %395 = vmatprep.subr.mxu0 0.0
    %396 = vmatpush1.msra.mxu0 0.0
    %397 = vmatprep.subr.mxu0 0.0
    %398 = vmatpush1.msra.mxu0 0.0
    %399 = vmatprep.subr.mxu0 0.0
    %400 = vmatpush1.msra.mxu0 0.0
    %401 = vmatprep.subr.mxu0 0.0
    %402 = vmatpush1.msra.mxu0 0.0
    %403 = vmatprep.subr.mxu0 0.0
    %404 = vmatpush1.msra.mxu0 0.0
    %405 = vmatprep.subr.mxu0 0.0
    %406 = vmatpush1.msra.mxu0 0.0
    %407 = vmatprep.subr.mxu0 0.0
    %408 = vmatpush1.msra.mxu0 0.0
    %409 = vmatprep.subr.mxu0 0.0
    %410 = vmatpush1.msra.mxu0 0.0
    %411 = vmatprep.subr.mxu0 0.0
    %412 = vmatpush1.msra.mxu0 0.0
    %413 = vmatprep.subr.mxu0 0.0
    %414 = vmatpush1.msra.mxu0 0.0
    %415 = vmatprep.subr.mxu0 0.0
    %416 = vmatpush1.msra.mxu0 0.0
    %417 = vmatprep.subr.mxu0 0.0
    %418 = vmatpush1.msra.mxu0 0.0
    %419 = vmatprep.subr.mxu0 0.0
    %420 = vmatpush1.msra.mxu0 0.0
    %421 = vmatprep.subr.mxu0 0.0
    %422 = vmatpush1.msra.mxu0 0.0
    %423 = vmatprep.subr.mxu0 0.0
    %424 = vmatpush1.msra.mxu0 0.0
    %425 = vmatprep.subr.mxu0 0.0
    %426 = vmatpush1.msra.mxu0 0.0
    %427 = vmatprep.subr.mxu0 0.0
    %428 = vmatpush1.msra.mxu0 0.0
    %429 = vmatprep.subr.mxu0 0.0
    %430 = vmatpush1.msra.mxu0 0.0
    %431 = vmatprep.subr.mxu0 0.0
    %432 = vmatpush1.msra.mxu0 0.0
    %433 = vmatprep.subr.mxu0 0.0
    %434 = vmatpush1.msra.mxu0 0.0
    %435 = vmatprep.subr.mxu0 0.0
    %436 = vmatpush1.msra.mxu0 0.0
    %437 = vmatprep.mubr.f32.mxu0 0.0
    %438 = vmatmul.mubr.f32.gmra.mrb[0].mxu0 %v371
    %v439 = vpop.f32.mrb[0].mxu0
    %v440 = vadd.f32 %v364, %v439
    %v441 = vpop.f32.mrb[0].mxu0
    %442 = vdwg.mxu0
    %v443 = vadd.f32 %v440, %v224
    %v444 = vxor.u32 %v443, 2147483648
    %v445 = vmul.f32 %v444, 1.442695
    %v446 = vpow.pop %v445
    %v447 = vadd.f32 %v446, 1.0
    %v448 = vrcp.pop %v447
    %v449 = vmul.f32 1.0, %v448
    %v450 = vtanh.pop %v443
    %v451 = vmul.f32 %v449, %v244
    %453 = vrot.lane.b32.xlu0 %v450, 64
    %v454 = vpop.permute.xlu0 %453
    %v456 = vmul.f32 %v449, %v454
    %458 = vrot.lane.b32.xlu0 %v456, 96
    %v459 = vpop.permute.xlu0 %458
    %v461 = vadd.f32 %v451, %v459
    %v462 = vtanh.pop %v461
    %464 = vrot.lane.b32.xlu0 %v462, 64
    %v465 = vpop.permute.xlu0 %464
    %v467 = vmul.f32 %v449, %v465
    %v470 = vunpack.c.l.s4 1966171168
    %v471 = vunpack.c.0.s8 %v470
    %v472 = vlaneseq
    %v473 = vshrl.u32 %v472, 7
    %v474 = vsub.s32 %v471, %v473
    %v475 = vrot.slane %v467, %v474
    %v476 = vcombine.high %v475, %v475
    %v478 = vunpack.c.l.s4 1966171168
    %v479 = vunpack.c.0.s8 %v478
    %v480 = vlaneseq
    %v481 = vshrl.u32 %v480, 7
    %v482 = vsub.s32 %v479, %v481
    %v483 = vrot.slane %v475, %v482
    %v485 = vunpack.c.l.s4 1966171168
    %v486 = vunpack.c.0.s8 %v485
    %v487 = vlaneseq
    %v488 = vshrl.u32 %v487, 7
    %v489 = vsub.s32 %v486, %v488
    %v490 = vrot.slane %v476, %v489
    %v491 = vlaneseq
    %v492 = vshrl.u32 %v491, 7
    %v493 = vsub.s32 0, %v492
    %v494 = vrot.slane %v483, %v493
    %v495 = vlaneseq
    %v496 = vshrl.u32 %v495, 7
    %v497 = vsub.s32 0, %v496
    %v498 = vrot.slane %v490, %v497
    %499 = vrot.lane.b32.xlu0 %v494, 64
    %v500 = vpop.permute.xlu0 %499
    %501 = vrot.lane.b32.xlu0 %v498, 64
    %v502 = vpop.permute.xlu0 %501
    %505 = vst.msk [vmem:[#allocation8 + $0x6] sm:$0x1] %vm288, %v500
    %506 = vst.msk [vmem:[#allocation8 + $0xe] sm:$0x1] %vm288, %v502
    %v507 = vld [vmem:[#allocation2 + $0x2] sm:$0x1]
    %v508 = vld [vmem:[#allocation2 + $0xa] sm:$0x1]
    %509 = vrot.lane.b32.xlu0 %v467, 64
    %v510 = vpop.permute.xlu0 %509
    %v511 = vsel %vm68, %v510, 0
    %513 = vmatprep.subr.mxu0 0.0
    %514 = vmatpush1.msra.mxu0 %v61
    %515 = vmatprep.subr.mxu0 0.0
    %516 = vmatpush1.msra.mxu0 %v62
    %517 = vmatprep.subr.mxu0 0.0
    %518 = vmatpush1.msra.mxu0 %v63
    %519 = vmatprep.subr.mxu0 0.0
    %520 = vmatpush1.msra.mxu0 %v64
    %521 = vmatprep.subr.mxu0 0.0
    %522 = vmatpush1.msra.mxu0 0.0
    %523 = vmatprep.subr.mxu0 0.0
    %524 = vmatpush1.msra.mxu0 0.0
    %525 = vmatprep.subr.mxu0 0.0
    %526 = vmatpush1.msra.mxu0 0.0
    %527 = vmatprep.subr.mxu0 0.0
    %528 = vmatpush1.msra.mxu0 0.0
    %529 = vmatprep.subr.mxu0 0.0
    %530 = vmatpush1.msra.mxu0 0.0
    %531 = vmatprep.subr.mxu0 0.0
    %532 = vmatpush1.msra.mxu0 0.0
    %533 = vmatprep.subr.mxu0 0.0
    %534 = vmatpush1.msra.mxu0 0.0
    %535 = vmatprep.subr.mxu0 0.0
    %536 = vmatpush1.msra.mxu0 0.0
    %537 = vmatprep.subr.mxu0 0.0
    %538 = vmatpush1.msra.mxu0 0.0
    %539 = vmatprep.subr.mxu0 0.0
    %540 = vmatpush1.msra.mxu0 0.0
    %541 = vmatprep.subr.mxu0 0.0
    %542 = vmatpush1.msra.mxu0 0.0
    %543 = vmatprep.subr.mxu0 0.0
    %544 = vmatpush1.msra.mxu0 0.0
    %545 = vmatprep.subr.mxu0 0.0
    %546 = vmatpush1.msra.mxu0 0.0
    %547 = vmatprep.subr.mxu0 0.0
    %548 = vmatpush1.msra.mxu0 0.0
    %549 = vmatprep.subr.mxu0 0.0
    %550 = vmatpush1.msra.mxu0 0.0
    %551 = vmatprep.subr.mxu0 0.0
    %552 = vmatpush1.msra.mxu0 0.0
    %553 = vmatprep.subr.mxu0 0.0
    %554 = vmatpush1.msra.mxu0 0.0
    %555 = vmatprep.subr.mxu0 0.0
    %556 = vmatpush1.msra.mxu0 0.0
    %557 = vmatprep.subr.mxu0 0.0
    %558 = vmatpush1.msra.mxu0 0.0
    %559 = vmatprep.subr.mxu0 0.0
    %560 = vmatpush1.msra.mxu0 0.0
    %561 = vmatprep.subr.mxu0 0.0
    %562 = vmatpush1.msra.mxu0 0.0
    %563 = vmatprep.subr.mxu0 0.0
    %564 = vmatpush1.msra.mxu0 0.0
    %565 = vmatprep.subr.mxu0 0.0
    %566 = vmatpush1.msra.mxu0 0.0
    %567 = vmatprep.subr.mxu0 0.0
    %568 = vmatpush1.msra.mxu0 0.0
    %569 = vmatprep.subr.mxu0 0.0
    %570 = vmatpush1.msra.mxu0 0.0
    %571 = vmatprep.subr.mxu0 0.0
    %572 = vmatpush1.msra.mxu0 0.0
    %573 = vmatprep.subr.mxu0 0.0
    %574 = vmatpush1.msra.mxu0 0.0
    %575 = vmatprep.subr.mxu0 0.0
    %576 = vmatpush1.msra.mxu0 0.0
    %577 = vmatprep.mubr.f32.mxu0 0.0
    %578 = vmatmul.mubr.f32.gmra.mrb[0].mxu0 %v511
    %v579 = vpop.f32.mrb[0].mxu0
    %v580 = vadd.f32 0.0, %v579
    %v581 = vpop.f32.mrb[0].mxu0
    %582 = vdwg.mxu0
    %v585 = vrot.slane %v508, 7
    %v586 = vsel %vm145, %v585, %v507
    %v587 = vsel %vm147, %v586, 0
    %589 = vmatprep.subr.mxu0 0.0
    %590 = vmatpush1.msra.mxu0 %v59
    %591 = vmatprep.subr.mxu0 0.0
    %592 = vmatpush1.msra.mxu0 %v60
    %593 = vmatprep.subr.mxu0 0.0
    %594 = vmatpush1.msra.mxu0 0.0
    %595 = vmatprep.subr.mxu0 0.0
    %596 = vmatpush1.msra.mxu0 0.0
    %597 = vmatprep.subr.mxu0 0.0
    %598 = vmatpush1.msra.mxu0 0.0
    %599 = vmatprep.subr.mxu0 0.0
    %600 = vmatpush1.msra.mxu0 0.0
    %601 = vmatprep.subr.mxu0 0.0
    %602 = vmatpush1.msra.mxu0 0.0
    %603 = vmatprep.subr.mxu0 0.0
    %604 = vmatpush1.msra.mxu0 0.0
    %605 = vmatprep.subr.mxu0 0.0
    %606 = vmatpush1.msra.mxu0 0.0
    %607 = vmatprep.subr.mxu0 0.0
    %608 = vmatpush1.msra.mxu0 0.0
    %609 = vmatprep.subr.mxu0 0.0
    %610 = vmatpush1.msra.mxu0 0.0
    %611 = vmatprep.subr.mxu0 0.0
    %612 = vmatpush1.msra.mxu0 0.0
    %613 = vmatprep.subr.mxu0 0.0
    %614 = vmatpush1.msra.mxu0 0.0
    %615 = vmatprep.subr.mxu0 0.0
    %616 = vmatpush1.msra.mxu0 0.0
    %617 = vmatprep.subr.mxu0 0.0
    %618 = vmatpush1.msra.mxu0 0.0
    %619 = vmatprep.subr.mxu0 0.0
    %620 = vmatpush1.msra.mxu0 0.0
    %621 = vmatprep.subr.mxu0 0.0
    %622 = vmatpush1.msra.mxu0 0.0
    %623 = vmatprep.subr.mxu0 0.0
    %624 = vmatpush1.msra.mxu0 0.0
    %625 = vmatprep.subr.mxu0 0.0
    %626 = vmatpush1.msra.mxu0 0.0
    %627 = vmatprep.subr.mxu0 0.0
    %628 = vmatpush1.msra.mxu0 0.0
    %629 = vmatprep.subr.mxu0 0.0
    %630 = vmatpush1.msra.mxu0 0.0
    %631 = vmatprep.subr.mxu0 0.0
    %632 = vmatpush1.msra.mxu0 0.0
    %633 = vmatprep.subr.mxu0 0.0
    %634 = vmatpush1.msra.mxu0 0.0
    %635 = vmatprep.subr.mxu0 0.0
    %636 = vmatpush1.msra.mxu0 0.0
    %637 = vmatprep.subr.mxu0 0.0
    %638 = vmatpush1.msra.mxu0 0.0
    %639 = vmatprep.subr.mxu0 0.0
    %640 = vmatpush1.msra.mxu0 0.0
    %641 = vmatprep.subr.mxu0 0.0
    %642 = vmatpush1.msra.mxu0 0.0
    %643 = vmatprep.subr.mxu0 0.0
    %644 = vmatpush1.msra.mxu0 0.0
    %645 = vmatprep.subr.mxu0 0.0
    %646 = vmatpush1.msra.mxu0 0.0
    %647 = vmatprep.subr.mxu0 0.0
    %648 = vmatpush1.msra.mxu0 0.0
    %649 = vmatprep.subr.mxu0 0.0
    %650 = vmatpush1.msra.mxu0 0.0
    %651 = vmatprep.subr.mxu0 0.0
    %652 = vmatpush1.msra.mxu0 0.0
    %653 = vmatprep.mubr.f32.mxu0 0.0
    %654 = vmatmul.mubr.f32.gmra.mrb[0].mxu0 %v587
    %v655 = vpop.f32.mrb[0].mxu0
    %v656 = vadd.f32 %v580, %v655
    %v657 = vpop.f32.mrb[0].mxu0
    %658 = vdwg.mxu0
    %v659 = vadd.f32 %v656, %v224
    %v660 = vxor.u32 %v659, 2147483648
    %v661 = vmul.f32 %v660, 1.442695
    %v662 = vpow.pop %v661
    %v663 = vadd.f32 %v662, 1.0
    %v664 = vrcp.pop %v663
    %v665 = vmul.f32 1.0, %v664
    %v666 = vtanh.pop %v659
    %v667 = vmul.f32 %v665, %v461
    %669 = vrot.lane.b32.xlu0 %v666, 64
    %v670 = vpop.permute.xlu0 %669
    %v672 = vmul.f32 %v665, %v670
    %674 = vrot.lane.b32.xlu0 %v672, 96
    %v675 = vpop.permute.xlu0 %674
    %v677 = vadd.f32 %v667, %v675
    %v678 = vtanh.pop %v677
    %680 = vrot.lane.b32.xlu0 %v678, 64
    %v681 = vpop.permute.xlu0 %680
    %v683 = vmul.f32 %v665, %v681
    %v686 = vunpack.c.l.s4 1966171168
    %v687 = vunpack.c.0.s8 %v686
    %v688 = vlaneseq
    %v689 = vshrl.u32 %v688, 7
    %v690 = vsub.s32 %v687, %v689
    %v691 = vrot.slane %v683, %v690
    %v692 = vcombine.high %v691, %v691
    %v694 = vunpack.c.l.s4 1966171168
    %v695 = vunpack.c.0.s8 %v694
    %v696 = vlaneseq
    %v697 = vshrl.u32 %v696, 7
    %v698 = vsub.s32 %v695, %v697
    %v699 = vrot.slane %v691, %v698
    %v701 = vunpack.c.l.s4 1966171168
    %v702 = vunpack.c.0.s8 %v701
    %v703 = vlaneseq
    %v704 = vshrl.u32 %v703, 7
    %v705 = vsub.s32 %v702, %v704
    %v706 = vrot.slane %v692, %v705
    %v707 = vlaneseq
    %v708 = vshrl.u32 %v707, 7
    %v709 = vsub.s32 0, %v708
    %v710 = vrot.slane %v699, %v709
    %v711 = vlaneseq
    %v712 = vshrl.u32 %v711, 7
    %v713 = vsub.s32 0, %v712
    %v714 = vrot.slane %v706, %v713
    %715 = vrot.lane.b32.xlu0 %v710, 64
    %v716 = vpop.permute.xlu0 %715
    %717 = vrot.lane.b32.xlu0 %v714, 64
    %v718 = vpop.permute.xlu0 %717
    %721 = vst.msk [vmem:[#allocation8 + $0x5] sm:$0x1] %vm288, %v716
    %722 = vst.msk [vmem:[#allocation8 + $0xd] sm:$0x1] %vm288, %v718
    %v723 = vld [vmem:[#allocation2 + $0x3] sm:$0x1]
    %v724 = vld [vmem:[#allocation2 + $0xb] sm:$0x1]
    %725 = vrot.lane.b32.xlu0 %v683, 64
    %v726 = vpop.permute.xlu0 %725
    %v727 = vsel %vm68, %v726, 0
    %729 = vmatprep.subr.mxu0 0.0
    %730 = vmatpush1.msra.mxu0 %v61
    %731 = vmatprep.subr.mxu0 0.0
    %732 = vmatpush1.msra.mxu0 %v62
    %733 = vmatprep.subr.mxu0 0.0
    %734 = vmatpush1.msra.mxu0 %v63
    %735 = vmatprep.subr.mxu0 0.0
    %736 = vmatpush1.msra.mxu0 %v64
    %737 = vmatprep.subr.mxu0 0.0
    %738 = vmatpush1.msra.mxu0 0.0
    %739 = vmatprep.subr.mxu0 0.0
    %740 = vmatpush1.msra.mxu0 0.0
    %741 = vmatprep.subr.mxu0 0.0
    %742 = vmatpush1.msra.mxu0 0.0
    %743 = vmatprep.subr.mxu0 0.0
    %744 = vmatpush1.msra.mxu0 0.0
    %745 = vmatprep.subr.mxu0 0.0
    %746 = vmatpush1.msra.mxu0 0.0
    %747 = vmatprep.subr.mxu0 0.0
    %748 = vmatpush1.msra.mxu0 0.0
    %749 = vmatprep.subr.mxu0 0.0
    %750 = vmatpush1.msra.mxu0 0.0
    %751 = vmatprep.subr.mxu0 0.0
    %752 = vmatpush1.msra.mxu0 0.0
    %753 = vmatprep.subr.mxu0 0.0
    %754 = vmatpush1.msra.mxu0 0.0
    %755 = vmatprep.subr.mxu0 0.0
    %756 = vmatpush1.msra.mxu0 0.0
    %757 = vmatprep.subr.mxu0 0.0
    %758 = vmatpush1.msra.mxu0 0.0
    %759 = vmatprep.subr.mxu0 0.0
    %760 = vmatpush1.msra.mxu0 0.0
    %761 = vmatprep.subr.mxu0 0.0
    %762 = vmatpush1.msra.mxu0 0.0
    %763 = vmatprep.subr.mxu0 0.0
    %764 = vmatpush1.msra.mxu0 0.0
    %765 = vmatprep.subr.mxu0 0.0
    %766 = vmatpush1.msra.mxu0 0.0
    %767 = vmatprep.subr.mxu0 0.0
    %768 = vmatpush1.msra.mxu0 0.0
    %769 = vmatprep.subr.mxu0 0.0
    %770 = vmatpush1.msra.mxu0 0.0
    %771 = vmatprep.subr.mxu0 0.0
    %772 = vmatpush1.msra.mxu0 0.0
    %773 = vmatprep.subr.mxu0 0.0
    %774 = vmatpush1.msra.mxu0 0.0
    %775 = vmatprep.subr.mxu0 0.0
    %776 = vmatpush1.msra.mxu0 0.0
    %777 = vmatprep.subr.mxu0 0.0
    %778 = vmatpush1.msra.mxu0 0.0
    %779 = vmatprep.subr.mxu0 0.0
    %780 = vmatpush1.msra.mxu0 0.0
    %781 = vmatprep.subr.mxu0 0.0
    %782 = vmatpush1.msra.mxu0 0.0
    %783 = vmatprep.subr.mxu0 0.0
    %784 = vmatpush1.msra.mxu0 0.0
    %785 = vmatprep.subr.mxu0 0.0
    %786 = vmatpush1.msra.mxu0 0.0
    %787 = vmatprep.subr.mxu0 0.0
    %788 = vmatpush1.msra.mxu0 0.0
    %789 = vmatprep.subr.mxu0 0.0
    %790 = vmatpush1.msra.mxu0 0.0
    %791 = vmatprep.subr.mxu0 0.0
    %792 = vmatpush1.msra.mxu0 0.0
    %793 = vmatprep.mubr.f32.mxu0 0.0
    %794 = vmatmul.mubr.f32.gmra.mrb[0].mxu0 %v727
    %v795 = vpop.f32.mrb[0].mxu0
    %v796 = vadd.f32 0.0, %v795
    %v797 = vpop.f32.mrb[0].mxu0
    %798 = vdwg.mxu0
    %v801 = vrot.slane %v724, 7
    %v802 = vsel %vm145, %v801, %v723
    %v803 = vsel %vm147, %v802, 0
    %805 = vmatprep.subr.mxu0 0.0
    %806 = vmatpush1.msra.mxu0 %v59
    %807 = vmatprep.subr.mxu0 0.0
    %808 = vmatpush1.msra.mxu0 %v60
    %809 = vmatprep.subr.mxu0 0.0
    %810 = vmatpush1.msra.mxu0 0.0
    %811 = vmatprep.subr.mxu0 0.0
    %812 = vmatpush1.msra.mxu0 0.0
    %813 = vmatprep.subr.mxu0 0.0
    %814 = vmatpush1.msra.mxu0 0.0
    %815 = vmatprep.subr.mxu0 0.0
    %816 = vmatpush1.msra.mxu0 0.0
    %817 = vmatprep.subr.mxu0 0.0
    %818 = vmatpush1.msra.mxu0 0.0
    %819 = vmatprep.subr.mxu0 0.0
    %820 = vmatpush1.msra.mxu0 0.0
    %821 = vmatprep.subr.mxu0 0.0
    %822 = vmatpush1.msra.mxu0 0.0
    %823 = vmatprep.subr.mxu0 0.0
    %824 = vmatpush1.msra.mxu0 0.0
    %825 = vmatprep.subr.mxu0 0.0
    %826 = vmatpush1.msra.mxu0 0.0
    %827 = vmatprep.subr.mxu0 0.0
    %828 = vmatpush1.msra.mxu0 0.0
    %829 = vmatprep.subr.mxu0 0.0
    %830 = vmatpush1.msra.mxu0 0.0
    %831 = vmatprep.subr.mxu0 0.0
    %832 = vmatpush1.msra.mxu0 0.0
    %833 = vmatprep.subr.mxu0 0.0
    %834 = vmatpush1.msra.mxu0 0.0
    %835 = vmatprep.subr.mxu0 0.0
    %836 = vmatpush1.msra.mxu0 0.0
    %837 = vmatprep.subr.mxu0 0.0
    %838 = vmatpush1.msra.mxu0 0.0
    %839 = vmatprep.subr.mxu0 0.0
    %840 = vmatpush1.msra.mxu0 0.0
    %841 = vmatprep.subr.mxu0 0.0
    %842 = vmatpush1.msra.mxu0 0.0
    %843 = vmatprep.subr.mxu0 0.0
    %844 = vmatpush1.msra.mxu0 0.0
    %845 = vmatprep.subr.mxu0 0.0
    %846 = vmatpush1.msra.mxu0 0.0
    %847 = vmatprep.subr.mxu0 0.0
    %848 = vmatpush1.msra.mxu0 0.0
    %849 = vmatprep.subr.mxu0 0.0
    %850 = vmatpush1.msra.mxu0 0.0
    %851 = vmatprep.subr.mxu0 0.0
    %852 = vmatpush1.msra.mxu0 0.0
    %853 = vmatprep.subr.mxu0 0.0
    %854 = vmatpush1.msra.mxu0 0.0
    %855 = vmatprep.subr.mxu0 0.0
    %856 = vmatpush1.msra.mxu0 0.0
    %857 = vmatprep.subr.mxu0 0.0
    %858 = vmatpush1.msra.mxu0 0.0
    %859 = vmatprep.subr.mxu0 0.0
    %860 = vmatpush1.msra.mxu0 0.0
    %861 = vmatprep.subr.mxu0 0.0
    %862 = vmatpush1.msra.mxu0 0.0
    %863 = vmatprep.subr.mxu0 0.0
    %864 = vmatpush1.msra.mxu0 0.0
    %865 = vmatprep.subr.mxu0 0.0
    %866 = vmatpush1.msra.mxu0 0.0
    %867 = vmatprep.subr.mxu0 0.0
    %868 = vmatpush1.msra.mxu0 0.0
    %869 = vmatprep.mubr.f32.mxu0 0.0
    %870 = vmatmul.mubr.f32.gmra.mrb[0].mxu0 %v803
    %v871 = vpop.f32.mrb[0].mxu0
    %v872 = vadd.f32 %v796, %v871
    %v873 = vpop.f32.mrb[0].mxu0
    %874 = vdwg.mxu0
    %v875 = vadd.f32 %v872, %v224
    %v876 = vxor.u32 %v875, 2147483648
    %v877 = vmul.f32 %v876, 1.442695
    %v878 = vpow.pop %v877
    %v879 = vadd.f32 %v878, 1.0
    %v880 = vrcp.pop %v879
    %v881 = vmul.f32 1.0, %v880
    %v882 = vtanh.pop %v875
    %v883 = vmul.f32 %v881, %v677
    %885 = vrot.lane.b32.xlu0 %v882, 64
    %v886 = vpop.permute.xlu0 %885
    %v888 = vmul.f32 %v881, %v886
    %890 = vrot.lane.b32.xlu0 %v888, 96
    %v891 = vpop.permute.xlu0 %890
    %v893 = vadd.f32 %v883, %v891
    %v894 = vtanh.pop %v893
    %896 = vrot.lane.b32.xlu0 %v894, 64
    %v897 = vpop.permute.xlu0 %896
    %v899 = vmul.f32 %v881, %v897
    %v902 = vunpack.c.l.s4 1966171168
    %v903 = vunpack.c.0.s8 %v902
    %v904 = vlaneseq
    %v905 = vshrl.u32 %v904, 7
    %v906 = vsub.s32 %v903, %v905
    %v907 = vrot.slane %v899, %v906
    %v908 = vcombine.high %v907, %v907
    %v910 = vunpack.c.l.s4 1966171168
    %v911 = vunpack.c.0.s8 %v910
    %v912 = vlaneseq
    %v913 = vshrl.u32 %v912, 7
    %v914 = vsub.s32 %v911, %v913
    %v915 = vrot.slane %v907, %v914
    %v917 = vunpack.c.l.s4 1966171168
    %v918 = vunpack.c.0.s8 %v917
    %v919 = vlaneseq
    %v920 = vshrl.u32 %v919, 7
    %v921 = vsub.s32 %v918, %v920
    %v922 = vrot.slane %v908, %v921
    %v923 = vlaneseq
    %v924 = vshrl.u32 %v923, 7
    %v925 = vsub.s32 0, %v924
    %v926 = vrot.slane %v915, %v925
    %v927 = vlaneseq
    %v928 = vshrl.u32 %v927, 7
    %v929 = vsub.s32 0, %v928
    %v930 = vrot.slane %v922, %v929
    %931 = vrot.lane.b32.xlu0 %v926, 64
    %v932 = vpop.permute.xlu0 %931
    %933 = vrot.lane.b32.xlu0 %v930, 64
    %v934 = vpop.permute.xlu0 %933
    %937 = vst.msk [vmem:[#allocation8 + $0x4] sm:$0x1] %vm288, %v932
    %938 = vst.msk [vmem:[#allocation8 + $0xc] sm:$0x1] %vm288, %v934
    %v939 = vld [vmem:[#allocation2 + $0x4] sm:$0x1]
    %v940 = vld [vmem:[#allocation2 + $0xc] sm:$0x1]
    %941 = vrot.lane.b32.xlu0 %v899, 64
    %v942 = vpop.permute.xlu0 %941
    %v943 = vsel %vm68, %v942, 0
    %945 = vmatprep.subr.mxu0 0.0
    %946 = vmatpush1.msra.mxu0 %v61
    %947 = vmatprep.subr.mxu0 0.0
    %948 = vmatpush1.msra.mxu0 %v62
    %949 = vmatprep.subr.mxu0 0.0
    %950 = vmatpush1.msra.mxu0 %v63
    %951 = vmatprep.subr.mxu0 0.0
    %952 = vmatpush1.msra.mxu0 %v64
    %953 = vmatprep.subr.mxu0 0.0
    %954 = vmatpush1.msra.mxu0 0.0
    %955 = vmatprep.subr.mxu0 0.0
    %956 = vmatpush1.msra.mxu0 0.0
    %957 = vmatprep.subr.mxu0 0.0
    %958 = vmatpush1.msra.mxu0 0.0
    %959 = vmatprep.subr.mxu0 0.0
    %960 = vmatpush1.msra.mxu0 0.0
    %961 = vmatprep.subr.mxu0 0.0
    %962 = vmatpush1.msra.mxu0 0.0
    %963 = vmatprep.subr.mxu0 0.0
    %964 = vmatpush1.msra.mxu0 0.0
    %965 = vmatprep.subr.mxu0 0.0
    %966 = vmatpush1.msra.mxu0 0.0
    %967 = vmatprep.subr.mxu0 0.0
    %968 = vmatpush1.msra.mxu0 0.0
    %969 = vmatprep.subr.mxu0 0.0
    %970 = vmatpush1.msra.mxu0 0.0
    %971 = vmatprep.subr.mxu0 0.0
    %972 = vmatpush1.msra.mxu0 0.0
    %973 = vmatprep.subr.mxu0 0.0
    %974 = vmatpush1.msra.mxu0 0.0
    %975 = vmatprep.subr.mxu0 0.0
    %976 = vmatpush1.msra.mxu0 0.0
    %977 = vmatprep.subr.mxu0 0.0
    %978 = vmatpush1.msra.mxu0 0.0
    %979 = vmatprep.subr.mxu0 0.0
    %980 = vmatpush1.msra.mxu0 0.0
    %981 = vmatprep.subr.mxu0 0.0
    %982 = vmatpush1.msra.mxu0 0.0
    %983 = vmatprep.subr.mxu0 0.0
    %984 = vmatpush1.msra.mxu0 0.0
    %985 = vmatprep.subr.mxu0 0.0
    %986 = vmatpush1.msra.mxu0 0.0
    %987 = vmatprep.subr.mxu0 0.0
    %988 = vmatpush1.msra.mxu0 0.0
    %989 = vmatprep.subr.mxu0 0.0
    %990 = vmatpush1.msra.mxu0 0.0
    %991 = vmatprep.subr.mxu0 0.0
    %992 = vmatpush1.msra.mxu0 0.0
    %993 = vmatprep.subr.mxu0 0.0
    %994 = vmatpush1.msra.mxu0 0.0
    %995 = vmatprep.subr.mxu0 0.0
    %996 = vmatpush1.msra.mxu0 0.0
    %997 = vmatprep.subr.mxu0 0.0
    %998 = vmatpush1.msra.mxu0 0.0
    %999 = vmatprep.subr.mxu0 0.0
    %1000 = vmatpush1.msra.mxu0 0.0
    %1001 = vmatprep.subr.mxu0 0.0
    %1002 = vmatpush1.msra.mxu0 0.0
    %1003 = vmatprep.subr.mxu0 0.0
    %1004 = vmatpush1.msra.mxu0 0.0
    %1005 = vmatprep.subr.mxu0 0.0
    %1006 = vmatpush1.msra.mxu0 0.0
    %1007 = vmatprep.subr.mxu0 0.0
    %1008 = vmatpush1.msra.mxu0 0.0
    %1009 = vmatprep.mubr.f32.mxu0 0.0
    %1010 = vmatmul.mubr.f32.gmra.mrb[0].mxu0 %v943
    %v1011 = vpop.f32.mrb[0].mxu0
    %v1012 = vadd.f32 0.0, %v1011
    %v1013 = vpop.f32.mrb[0].mxu0
    %1014 = vdwg.mxu0
    %v1017 = vrot.slane %v940, 7
    %v1018 = vsel %vm145, %v1017, %v939
    %v1019 = vsel %vm147, %v1018, 0
    %1021 = vmatprep.subr.mxu0 0.0
    %1022 = vmatpush1.msra.mxu0 %v59
    %1023 = vmatprep.subr.mxu0 0.0
    %1024 = vmatpush1.msra.mxu0 %v60
    %1025 = vmatprep.subr.mxu0 0.0
    %1026 = vmatpush1.msra.mxu0 0.0
    %1027 = vmatprep.subr.mxu0 0.0
    %1028 = vmatpush1.msra.mxu0 0.0
    %1029 = vmatprep.subr.mxu0 0.0
    %1030 = vmatpush1.msra.mxu0 0.0
    %1031 = vmatprep.subr.mxu0 0.0
    %1032 = vmatpush1.msra.mxu0 0.0
    %1033 = vmatprep.subr.mxu0 0.0
    %1034 = vmatpush1.msra.mxu0 0.0
    %1035 = vmatprep.subr.mxu0 0.0
    %1036 = vmatpush1.msra.mxu0 0.0
    %1037 = vmatprep.subr.mxu0 0.0
    %1038 = vmatpush1.msra.mxu0 0.0
    %1039 = vmatprep.subr.mxu0 0.0
    %1040 = vmatpush1.msra.mxu0 0.0
    %1041 = vmatprep.subr.mxu0 0.0
    %1042 = vmatpush1.msra.mxu0 0.0
    %1043 = vmatprep.subr.mxu0 0.0
    %1044 = vmatpush1.msra.mxu0 0.0
    %1045 = vmatprep.subr.mxu0 0.0
    %1046 = vmatpush1.msra.mxu0 0.0
    %1047 = vmatprep.subr.mxu0 0.0
    %1048 = vmatpush1.msra.mxu0 0.0
    %1049 = vmatprep.subr.mxu0 0.0
    %1050 = vmatpush1.msra.mxu0 0.0
    %1051 = vmatprep.subr.mxu0 0.0
    %1052 = vmatpush1.msra.mxu0 0.0
    %1053 = vmatprep.subr.mxu0 0.0
    %1054 = vmatpush1.msra.mxu0 0.0
    %1055 = vmatprep.subr.mxu0 0.0
    %1056 = vmatpush1.msra.mxu0 0.0
    %1057 = vmatprep.subr.mxu0 0.0
    %1058 = vmatpush1.msra.mxu0 0.0
    %1059 = vmatprep.subr.mxu0 0.0
    %1060 = vmatpush1.msra.mxu0 0.0
    %1061 = vmatprep.subr.mxu0 0.0
    %1062 = vmatpush1.msra.mxu0 0.0
    %1063 = vmatprep.subr.mxu0 0.0
    %1064 = vmatpush1.msra.mxu0 0.0
    %1065 = vmatprep.subr.mxu0 0.0
    %1066 = vmatpush1.msra.mxu0 0.0
    %1067 = vmatprep.subr.mxu0 0.0
    %1068 = vmatpush1.msra.mxu0 0.0
    %1069 = vmatprep.subr.mxu0 0.0
    %1070 = vmatpush1.msra.mxu0 0.0
    %1071 = vmatprep.subr.mxu0 0.0
    %1072 = vmatpush1.msra.mxu0 0.0
    %1073 = vmatprep.subr.mxu0 0.0
    %1074 = vmatpush1.msra.mxu0 0.0
    %1075 = vmatprep.subr.mxu0 0.0
    %1076 = vmatpush1.msra.mxu0 0.0
    %1077 = vmatprep.subr.mxu0 0.0
    %1078 = vmatpush1.msra.mxu0 0.0
    %1079 = vmatprep.subr.mxu0 0.0
    %1080 = vmatpush1.msra.mxu0 0.0
    %1081 = vmatprep.subr.mxu0 0.0
    %1082 = vmatpush1.msra.mxu0 0.0
    %1083 = vmatprep.subr.mxu0 0.0
    %1084 = vmatpush1.msra.mxu0 0.0
    %1085 = vmatprep.mubr.f32.mxu0 0.0
    %1086 = vmatmul.mubr.f32.gmra.mrb[0].mxu0 %v1019
    %v1087 = vpop.f32.mrb[0].mxu0
    %v1088 = vadd.f32 %v1012, %v1087
    %v1089 = vpop.f32.mrb[0].mxu0
    %1090 = vdwg.mxu0
    %v1091 = vadd.f32 %v1088, %v224
    %v1092 = vxor.u32 %v1091, 2147483648
    %v1093 = vmul.f32 %v1092, 1.442695
    %v1094 = vpow.pop %v1093
    %v1095 = vadd.f32 %v1094, 1.0
    %v1096 = vrcp.pop %v1095
    %v1097 = vmul.f32 1.0, %v1096
    %v1098 = vtanh.pop %v1091
    %v1099 = vmul.f32 %v1097, %v893
    %1101 = vrot.lane.b32.xlu0 %v1098, 64
    %v1102 = vpop.permute.xlu0 %1101
    %v1104 = vmul.f32 %v1097, %v1102
    %1106 = vrot.lane.b32.xlu0 %v1104, 96
    %v1107 = vpop.permute.xlu0 %1106
    %v1109 = vadd.f32 %v1099, %v1107
    %v1110 = vtanh.pop %v1109
    %1112 = vrot.lane.b32.xlu0 %v1110, 64
    %v1113 = vpop.permute.xlu0 %1112
    %v1115 = vmul.f32 %v1097, %v1113
    %v1118 = vunpack.c.l.s4 1966171168
    %v1119 = vunpack.c.0.s8 %v1118
    %v1120 = vlaneseq
    %v1121 = vshrl.u32 %v1120, 7
    %v1122 = vsub.s32 %v1119, %v1121
    %v1123 = vrot.slane %v1115, %v1122
    %v1124 = vcombine.high %v1123, %v1123
    %v1126 = vunpack.c.l.s4 1966171168
    %v1127 = vunpack.c.0.s8 %v1126
    %v1128 = vlaneseq
    %v1129 = vshrl.u32 %v1128, 7
    %v1130 = vsub.s32 %v1127, %v1129
    %v1131 = vrot.slane %v1123, %v1130
    %v1133 = vunpack.c.l.s4 1966171168
    %v1134 = vunpack.c.0.s8 %v1133
    %v1135 = vlaneseq
    %v1136 = vshrl.u32 %v1135, 7
    %v1137 = vsub.s32 %v1134, %v1136
    %v1138 = vrot.slane %v1124, %v1137
    %v1139 = vlaneseq
    %v1140 = vshrl.u32 %v1139, 7
    %v1141 = vsub.s32 0, %v1140
    %v1142 = vrot.slane %v1131, %v1141
    %v1143 = vlaneseq
    %v1144 = vshrl.u32 %v1143, 7
    %v1145 = vsub.s32 0, %v1144
    %v1146 = vrot.slane %v1138, %v1145
    %1147 = vrot.lane.b32.xlu0 %v1142, 64
    %v1148 = vpop.permute.xlu0 %1147
    %1149 = vrot.lane.b32.xlu0 %v1146, 64
    %v1150 = vpop.permute.xlu0 %1149
    %1153 = vst.msk [vmem:[#allocation8 + $0x3] sm:$0x1] %vm288, %v1148
    %1154 = vst.msk [vmem:[#allocation8 + $0xb] sm:$0x1] %vm288, %v1150
    %v1155 = vld [vmem:[#allocation2 + $0x5] sm:$0x1]
    %v1156 = vld [vmem:[#allocation2 + $0xd] sm:$0x1]
    %1157 = vrot.lane.b32.xlu0 %v1115, 64
    %v1158 = vpop.permute.xlu0 %1157
    %v1159 = vsel %vm68, %v1158, 0
    %1161 = vmatprep.subr.mxu0 0.0
    %1162 = vmatpush1.msra.mxu0 %v61
    %1163 = vmatprep.subr.mxu0 0.0
    %1164 = vmatpush1.msra.mxu0 %v62
    %1165 = vmatprep.subr.mxu0 0.0
    %1166 = vmatpush1.msra.mxu0 %v63
    %1167 = vmatprep.subr.mxu0 0.0
    %1168 = vmatpush1.msra.mxu0 %v64
    %1169 = vmatprep.subr.mxu0 0.0
    %1170 = vmatpush1.msra.mxu0 0.0
    %1171 = vmatprep.subr.mxu0 0.0
    %1172 = vmatpush1.msra.mxu0 0.0
    %1173 = vmatprep.subr.mxu0 0.0
    %1174 = vmatpush1.msra.mxu0 0.0
    %1175 = vmatprep.subr.mxu0 0.0
    %1176 = vmatpush1.msra.mxu0 0.0
    %1177 = vmatprep.subr.mxu0 0.0
    %1178 = vmatpush1.msra.mxu0 0.0
    %1179 = vmatprep.subr.mxu0 0.0
    %1180 = vmatpush1.msra.mxu0 0.0
    %1181 = vmatprep.subr.mxu0 0.0
    %1182 = vmatpush1.msra.mxu0 0.0
    %1183 = vmatprep.subr.mxu0 0.0
    %1184 = vmatpush1.msra.mxu0 0.0
    %1185 = vmatprep.subr.mxu0 0.0
    %1186 = vmatpush1.msra.mxu0 0.0
    %1187 = vmatprep.subr.mxu0 0.0
    %1188 = vmatpush1.msra.mxu0 0.0
    %1189 = vmatprep.subr.mxu0 0.0
    %1190 = vmatpush1.msra.mxu0 0.0
    %1191 = vmatprep.subr.mxu0 0.0
    %1192 = vmatpush1.msra.mxu0 0.0
    %1193 = vmatprep.subr.mxu0 0.0
    %1194 = vmatpush1.msra.mxu0 0.0
    %1195 = vmatprep.subr.mxu0 0.0
    %1196 = vmatpush1.msra.mxu0 0.0
    %1197 = vmatprep.subr.mxu0 0.0
    %1198 = vmatpush1.msra.mxu0 0.0
    %1199 = vmatprep.subr.mxu0 0.0
    %1200 = vmatpush1.msra.mxu0 0.0
    %1201 = vmatprep.subr.mxu0 0.0
    %1202 = vmatpush1.msra.mxu0 0.0
    %1203 = vmatprep.subr.mxu0 0.0
    %1204 = vmatpush1.msra.mxu0 0.0
    %1205 = vmatprep.subr.mxu0 0.0
    %1206 = vmatpush1.msra.mxu0 0.0
    %1207 = vmatprep.subr.mxu0 0.0
    %1208 = vmatpush1.msra.mxu0 0.0
    %1209 = vmatprep.subr.mxu0 0.0
    %1210 = vmatpush1.msra.mxu0 0.0
    %1211 = vmatprep.subr.mxu0 0.0
    %1212 = vmatpush1.msra.mxu0 0.0
    %1213 = vmatprep.subr.mxu0 0.0
    %1214 = vmatpush1.msra.mxu0 0.0
    %1215 = vmatprep.subr.mxu0 0.0
    %1216 = vmatpush1.msra.mxu0 0.0
    %1217 = vmatprep.subr.mxu0 0.0
    %1218 = vmatpush1.msra.mxu0 0.0
    %1219 = vmatprep.subr.mxu0 0.0
    %1220 = vmatpush1.msra.mxu0 0.0
    %1221 = vmatprep.subr.mxu0 0.0
    %1222 = vmatpush1.msra.mxu0 0.0
    %1223 = vmatprep.subr.mxu0 0.0
    %1224 = vmatpush1.msra.mxu0 0.0
    %1225 = vmatprep.mubr.f32.mxu0 0.0
    %1226 = vmatmul.mubr.f32.gmra.mrb[0].mxu0 %v1159
    %v1227 = vpop.f32.mrb[0].mxu0
    %v1228 = vadd.f32 0.0, %v1227
    %v1229 = vpop.f32.mrb[0].mxu0
    %1230 = vdwg.mxu0
    %v1233 = vrot.slane %v1156, 7
    %v1234 = vsel %vm145, %v1233, %v1155
    %v1235 = vsel %vm147, %v1234, 0
    %1237 = vmatprep.subr.mxu0 0.0
    %1238 = vmatpush1.msra.mxu0 %v59
    %1239 = vmatprep.subr.mxu0 0.0
    %1240 = vmatpush1.msra.mxu0 %v60
    %1241 = vmatprep.subr.mxu0 0.0
    %1242 = vmatpush1.msra.mxu0 0.0
    %1243 = vmatprep.subr.mxu0 0.0
    %1244 = vmatpush1.msra.mxu0 0.0
    %1245 = vmatprep.subr.mxu0 0.0
    %1246 = vmatpush1.msra.mxu0 0.0
    %1247 = vmatprep.subr.mxu0 0.0
    %1248 = vmatpush1.msra.mxu0 0.0
    %1249 = vmatprep.subr.mxu0 0.0
    %1250 = vmatpush1.msra.mxu0 0.0
    %1251 = vmatprep.subr.mxu0 0.0
    %1252 = vmatpush1.msra.mxu0 0.0
    %1253 = vmatprep.subr.mxu0 0.0
    %1254 = vmatpush1.msra.mxu0 0.0
    %1255 = vmatprep.subr.mxu0 0.0
    %1256 = vmatpush1.msra.mxu0 0.0
    %1257 = vmatprep.subr.mxu0 0.0
    %1258 = vmatpush1.msra.mxu0 0.0
    %1259 = vmatprep.subr.mxu0 0.0
    %1260 = vmatpush1.msra.mxu0 0.0
    %1261 = vmatprep.subr.mxu0 0.0
    %1262 = vmatpush1.msra.mxu0 0.0
    %1263 = vmatprep.subr.mxu0 0.0
    %1264 = vmatpush1.msra.mxu0 0.0
    %1265 = vmatprep.subr.mxu0 0.0
    %1266 = vmatpush1.msra.mxu0 0.0
    %1267 = vmatprep.subr.mxu0 0.0
    %1268 = vmatpush1.msra.mxu0 0.0
    %1269 = vmatprep.subr.mxu0 0.0
    %1270 = vmatpush1.msra.mxu0 0.0
    %1271 = vmatprep.subr.mxu0 0.0
    %1272 = vmatpush1.msra.mxu0 0.0
    %1273 = vmatprep.subr.mxu0 0.0
    %1274 = vmatpush1.msra.mxu0 0.0
    %1275 = vmatprep.subr.mxu0 0.0
    %1276 = vmatpush1.msra.mxu0 0.0
    %1277 = vmatprep.subr.mxu0 0.0
    %1278 = vmatpush1.msra.mxu0 0.0
    %1279 = vmatprep.subr.mxu0 0.0
    %1280 = vmatpush1.msra.mxu0 0.0
    %1281 = vmatprep.subr.mxu0 0.0
    %1282 = vmatpush1.msra.mxu0 0.0
    %1283 = vmatprep.subr.mxu0 0.0
    %1284 = vmatpush1.msra.mxu0 0.0
    %1285 = vmatprep.subr.mxu0 0.0
    %1286 = vmatpush1.msra.mxu0 0.0
    %1287 = vmatprep.subr.mxu0 0.0
    %1288 = vmatpush1.msra.mxu0 0.0
    %1289 = vmatprep.subr.mxu0 0.0
    %1290 = vmatpush1.msra.mxu0 0.0
    %1291 = vmatprep.subr.mxu0 0.0
    %1292 = vmatpush1.msra.mxu0 0.0
    %1293 = vmatprep.subr.mxu0 0.0
    %1294 = vmatpush1.msra.mxu0 0.0
    %1295 = vmatprep.subr.mxu0 0.0
    %1296 = vmatpush1.msra.mxu0 0.0
    %1297 = vmatprep.subr.mxu0 0.0
    %1298 = vmatpush1.msra.mxu0 0.0
    %1299 = vmatprep.subr.mxu0 0.0
    %1300 = vmatpush1.msra.mxu0 0.0
    %1301 = vmatprep.mubr.f32.mxu0 0.0
    %1302 = vmatmul.mubr.f32.gmra.mrb[0].mxu0 %v1235
    %v1303 = vpop.f32.mrb[0].mxu0
    %v1304 = vadd.f32 %v1228, %v1303
    %v1305 = vpop.f32.mrb[0].mxu0
    %1306 = vdwg.mxu0
    %v1307 = vadd.f32 %v1304, %v224
    %v1308 = vxor.u32 %v1307, 2147483648
    %v1309 = vmul.f32 %v1308, 1.442695
    %v1310 = vpow.pop %v1309
    %v1311 = vadd.f32 %v1310, 1.0
    %v1312 = vrcp.pop %v1311
    %v1313 = vmul.f32 1.0, %v1312
    %v1314 = vtanh.pop %v1307
    %v1315 = vmul.f32 %v1313, %v1109
    %1317 = vrot.lane.b32.xlu0 %v1314, 64
    %v1318 = vpop.permute.xlu0 %1317
    %v1320 = vmul.f32 %v1313, %v1318
    %1322 = vrot.lane.b32.xlu0 %v1320, 96
    %v1323 = vpop.permute.xlu0 %1322
    %v1325 = vadd.f32 %v1315, %v1323
    %v1326 = vtanh.pop %v1325
    %1328 = vrot.lane.b32.xlu0 %v1326, 64
    %v1329 = vpop.permute.xlu0 %1328
    %v1331 = vmul.f32 %v1313, %v1329
    %v1334 = vunpack.c.l.s4 1966171168
    %v1335 = vunpack.c.0.s8 %v1334
    %v1336 = vlaneseq
    %v1337 = vshrl.u32 %v1336, 7
    %v1338 = vsub.s32 %v1335, %v1337
    %v1339 = vrot.slane %v1331, %v1338
    %v1340 = vcombine.high %v1339, %v1339
    %v1342 = vunpack.c.l.s4 1966171168
    %v1343 = vunpack.c.0.s8 %v1342
    %v1344 = vlaneseq
    %v1345 = vshrl.u32 %v1344, 7
    %v1346 = vsub.s32 %v1343, %v1345
    %v1347 = vrot.slane %v1339, %v1346
    %v1349 = vunpack.c.l.s4 1966171168
    %v1350 = vunpack.c.0.s8 %v1349
    %v1351 = vlaneseq
    %v1352 = vshrl.u32 %v1351, 7
    %v1353 = vsub.s32 %v1350, %v1352
    %v1354 = vrot.slane %v1340, %v1353
    %v1355 = vlaneseq
    %v1356 = vshrl.u32 %v1355, 7
    %v1357 = vsub.s32 0, %v1356
    %v1358 = vrot.slane %v1347, %v1357
    %v1359 = vlaneseq
    %v1360 = vshrl.u32 %v1359, 7
    %v1361 = vsub.s32 0, %v1360
    %v1362 = vrot.slane %v1354, %v1361
    %1363 = vrot.lane.b32.xlu0 %v1358, 64
    %v1364 = vpop.permute.xlu0 %1363
    %1365 = vrot.lane.b32.xlu0 %v1362, 64
    %v1366 = vpop.permute.xlu0 %1365
    %1369 = vst.msk [vmem:[#allocation8 + $0x2] sm:$0x1] %vm288, %v1364
    %1370 = vst.msk [vmem:[#allocation8 + $0xa] sm:$0x1] %vm288, %v1366
    %v1371 = vld [vmem:[#allocation2 + $0x6] sm:$0x1]
    %v1372 = vld [vmem:[#allocation2 + $0xe] sm:$0x1]
    %1373 = vrot.lane.b32.xlu0 %v1331, 64
    %v1374 = vpop.permute.xlu0 %1373
    %v1375 = vsel %vm68, %v1374, 0
    %1377 = vmatprep.subr.mxu0 0.0
    %1378 = vmatpush1.msra.mxu0 %v61
    %1379 = vmatprep.subr.mxu0 0.0
    %1380 = vmatpush1.msra.mxu0 %v62
    %1381 = vmatprep.subr.mxu0 0.0
    %1382 = vmatpush1.msra.mxu0 %v63
    %1383 = vmatprep.subr.mxu0 0.0
    %1384 = vmatpush1.msra.mxu0 %v64
    %1385 = vmatprep.subr.mxu0 0.0
    %1386 = vmatpush1.msra.mxu0 0.0
    %1387 = vmatprep.subr.mxu0 0.0
    %1388 = vmatpush1.msra.mxu0 0.0
    %1389 = vmatprep.subr.mxu0 0.0
    %1390 = vmatpush1.msra.mxu0 0.0
    %1391 = vmatprep.subr.mxu0 0.0
    %1392 = vmatpush1.msra.mxu0 0.0
    %1393 = vmatprep.subr.mxu0 0.0
    %1394 = vmatpush1.msra.mxu0 0.0
    %1395 = vmatprep.subr.mxu0 0.0
    %1396 = vmatpush1.msra.mxu0 0.0
    %1397 = vmatprep.subr.mxu0 0.0
    %1398 = vmatpush1.msra.mxu0 0.0
    %1399 = vmatprep.subr.mxu0 0.0
    %1400 = vmatpush1.msra.mxu0 0.0
    %1401 = vmatprep.subr.mxu0 0.0
    %1402 = vmatpush1.msra.mxu0 0.0
    %1403 = vmatprep.subr.mxu0 0.0
    %1404 = vmatpush1.msra.mxu0 0.0
    %1405 = vmatprep.subr.mxu0 0.0
    %1406 = vmatpush1.msra.mxu0 0.0
    %1407 = vmatprep.subr.mxu0 0.0
    %1408 = vmatpush1.msra.mxu0 0.0
    %1409 = vmatprep.subr.mxu0 0.0
    %1410 = vmatpush1.msra.mxu0 0.0
    %1411 = vmatprep.subr.mxu0 0.0
    %1412 = vmatpush1.msra.mxu0 0.0
    %1413 = vmatprep.subr.mxu0 0.0
    %1414 = vmatpush1.msra.mxu0 0.0
    %1415 = vmatprep.subr.mxu0 0.0
    %1416 = vmatpush1.msra.mxu0 0.0
    %1417 = vmatprep.subr.mxu0 0.0
    %1418 = vmatpush1.msra.mxu0 0.0
    %1419 = vmatprep.subr.mxu0 0.0
    %1420 = vmatpush1.msra.mxu0 0.0
    %1421 = vmatprep.subr.mxu0 0.0
    %1422 = vmatpush1.msra.mxu0 0.0
    %1423 = vmatprep.subr.mxu0 0.0
    %1424 = vmatpush1.msra.mxu0 0.0
    %1425 = vmatprep.subr.mxu0 0.0
    %1426 = vmatpush1.msra.mxu0 0.0
    %1427 = vmatprep.subr.mxu0 0.0
    %1428 = vmatpush1.msra.mxu0 0.0
    %1429 = vmatprep.subr.mxu0 0.0
    %1430 = vmatpush1.msra.mxu0 0.0
    %1431 = vmatprep.subr.mxu0 0.0
    %1432 = vmatpush1.msra.mxu0 0.0
    %1433 = vmatprep.subr.mxu0 0.0
    %1434 = vmatpush1.msra.mxu0 0.0
    %1435 = vmatprep.subr.mxu0 0.0
    %1436 = vmatpush1.msra.mxu0 0.0
    %1437 = vmatprep.subr.mxu0 0.0
    %1438 = vmatpush1.msra.mxu0 0.0
    %1439 = vmatprep.subr.mxu0 0.0
    %1440 = vmatpush1.msra.mxu0 0.0
    %1441 = vmatprep.mubr.f32.mxu0 0.0
    %1442 = vmatmul.mubr.f32.gmra.mrb[0].mxu0 %v1375
    %v1443 = vpop.f32.mrb[0].mxu0
    %v1444 = vadd.f32 0.0, %v1443
    %v1445 = vpop.f32.mrb[0].mxu0
    %1446 = vdwg.mxu0
    %v1449 = vrot.slane %v1372, 7
    %v1450 = vsel %vm145, %v1449, %v1371
    %v1451 = vsel %vm147, %v1450, 0
    %1453 = vmatprep.subr.mxu0 0.0
    %1454 = vmatpush1.msra.mxu0 %v59
    %1455 = vmatprep.subr.mxu0 0.0
    %1456 = vmatpush1.msra.mxu0 %v60
    %1457 = vmatprep.subr.mxu0 0.0
    %1458 = vmatpush1.msra.mxu0 0.0
    %1459 = vmatprep.subr.mxu0 0.0
    %1460 = vmatpush1.msra.mxu0 0.0
    %1461 = vmatprep.subr.mxu0 0.0
    %1462 = vmatpush1.msra.mxu0 0.0
    %1463 = vmatprep.subr.mxu0 0.0
    %1464 = vmatpush1.msra.mxu0 0.0
    %1465 = vmatprep.subr.mxu0 0.0
    %1466 = vmatpush1.msra.mxu0 0.0
    %1467 = vmatprep.subr.mxu0 0.0
    %1468 = vmatpush1.msra.mxu0 0.0
    %1469 = vmatprep.subr.mxu0 0.0
    %1470 = vmatpush1.msra.mxu0 0.0
    %1471 = vmatprep.subr.mxu0 0.0
    %1472 = vmatpush1.msra.mxu0 0.0
    %1473 = vmatprep.subr.mxu0 0.0
    %1474 = vmatpush1.msra.mxu0 0.0
    %1475 = vmatprep.subr.mxu0 0.0
    %1476 = vmatpush1.msra.mxu0 0.0
    %1477 = vmatprep.subr.mxu0 0.0
    %1478 = vmatpush1.msra.mxu0 0.0
    %1479 = vmatprep.subr.mxu0 0.0
    %1480 = vmatpush1.msra.mxu0 0.0
    %1481 = vmatprep.subr.mxu0 0.0
    %1482 = vmatpush1.msra.mxu0 0.0
    %1483 = vmatprep.subr.mxu0 0.0
    %1484 = vmatpush1.msra.mxu0 0.0
    %1485 = vmatprep.subr.mxu0 0.0
    %1486 = vmatpush1.msra.mxu0 0.0
    %1487 = vmatprep.subr.mxu0 0.0
    %1488 = vmatpush1.msra.mxu0 0.0
    %1489 = vmatprep.subr.mxu0 0.0
    %1490 = vmatpush1.msra.mxu0 0.0
    %1491 = vmatprep.subr.mxu0 0.0
    %1492 = vmatpush1.msra.mxu0 0.0
    %1493 = vmatprep.subr.mxu0 0.0
    %1494 = vmatpush1.msra.mxu0 0.0
    %1495 = vmatprep.subr.mxu0 0.0
    %1496 = vmatpush1.msra.mxu0 0.0
    %1497 = vmatprep.subr.mxu0 0.0
    %1498 = vmatpush1.msra.mxu0 0.0
    %1499 = vmatprep.subr.mxu0 0.0
    %1500 = vmatpush1.msra.mxu0 0.0
    %1501 = vmatprep.subr.mxu0 0.0
    %1502 = vmatpush1.msra.mxu0 0.0
    %1503 = vmatprep.subr.mxu0 0.0
    %1504 = vmatpush1.msra.mxu0 0.0
    %1505 = vmatprep.subr.mxu0 0.0
    %1506 = vmatpush1.msra.mxu0 0.0
    %1507 = vmatprep.subr.mxu0 0.0
    %1508 = vmatpush1.msra.mxu0 0.0
    %1509 = vmatprep.subr.mxu0 0.0
    %1510 = vmatpush1.msra.mxu0 0.0
    %1511 = vmatprep.subr.mxu0 0.0
    %1512 = vmatpush1.msra.mxu0 0.0
    %1513 = vmatprep.subr.mxu0 0.0
    %1514 = vmatpush1.msra.mxu0 0.0
    %1515 = vmatprep.subr.mxu0 0.0
    %1516 = vmatpush1.msra.mxu0 0.0
    %1517 = vmatprep.mubr.f32.mxu0 0.0
    %1518 = vmatmul.mubr.f32.gmra.mrb[0].mxu0 %v1451
    %v1519 = vpop.f32.mrb[0].mxu0
    %v1520 = vadd.f32 %v1444, %v1519
    %v1521 = vpop.f32.mrb[0].mxu0
    %1522 = vdwg.mxu0
    %v1523 = vadd.f32 %v1520, %v224
    %v1524 = vxor.u32 %v1523, 2147483648
    %v1525 = vmul.f32 %v1524, 1.442695
    %v1526 = vpow.pop %v1525
    %v1527 = vadd.f32 %v1526, 1.0
    %v1528 = vrcp.pop %v1527
    %v1529 = vmul.f32 1.0, %v1528
    %v1530 = vtanh.pop %v1523
    %v1531 = vmul.f32 %v1529, %v1325
    %1533 = vrot.lane.b32.xlu0 %v1530, 64
    %v1534 = vpop.permute.xlu0 %1533
    %v1536 = vmul.f32 %v1529, %v1534
    %1538 = vrot.lane.b32.xlu0 %v1536, 96
    %v1539 = vpop.permute.xlu0 %1538
    %v1541 = vadd.f32 %v1531, %v1539
    %v1542 = vtanh.pop %v1541
    %1544 = vrot.lane.b32.xlu0 %v1542, 64
    %v1545 = vpop.permute.xlu0 %1544
    %v1547 = vmul.f32 %v1529, %v1545
    %v1550 = vunpack.c.l.s4 1966171168
    %v1551 = vunpack.c.0.s8 %v1550
    %v1552 = vlaneseq
    %v1553 = vshrl.u32 %v1552, 7
    %v1554 = vsub.s32 %v1551, %v1553
    %v1555 = vrot.slane %v1547, %v1554
    %v1556 = vcombine.high %v1555, %v1555
    %v1558 = vunpack.c.l.s4 1966171168
    %v1559 = vunpack.c.0.s8 %v1558
    %v1560 = vlaneseq
    %v1561 = vshrl.u32 %v1560, 7
    %v1562 = vsub.s32 %v1559, %v1561
    %v1563 = vrot.slane %v1555, %v1562
    %v1565 = vunpack.c.l.s4 1966171168
    %v1566 = vunpack.c.0.s8 %v1565
    %v1567 = vlaneseq
    %v1568 = vshrl.u32 %v1567, 7
    %v1569 = vsub.s32 %v1566, %v1568
    %v1570 = vrot.slane %v1556, %v1569
    %v1571 = vlaneseq
    %v1572 = vshrl.u32 %v1571, 7
    %v1573 = vsub.s32 0, %v1572
    %v1574 = vrot.slane %v1563, %v1573
    %v1575 = vlaneseq
    %v1576 = vshrl.u32 %v1575, 7
    %v1577 = vsub.s32 0, %v1576
    %v1578 = vrot.slane %v1570, %v1577
    %1579 = vrot.lane.b32.xlu0 %v1574, 64
    %v1580 = vpop.permute.xlu0 %1579
    %1581 = vrot.lane.b32.xlu0 %v1578, 64
    %v1582 = vpop.permute.xlu0 %1581
    %1585 = vst.msk [vmem:[#allocation8 + $0x1] sm:$0x1] %vm288, %v1580
    %1586 = vst.msk [vmem:[#allocation8 + $0x9] sm:$0x1] %vm288, %v1582
    %v1587 = vld [vmem:[#allocation2 + $0x7] sm:$0x1]
    %v1588 = vld [vmem:[#allocation2 + $0xf] sm:$0x1]
    %1589 = vrot.lane.b32.xlu0 %v1547, 64
    %v1590 = vpop.permute.xlu0 %1589
    %v1591 = vsel %vm68, %v1590, 0
    %1593 = vmatprep.subr.mxu0 0.0
    %1594 = vmatpush1.msra.mxu0 %v61
    %1595 = vmatprep.subr.mxu0 0.0
    %1596 = vmatpush1.msra.mxu0 %v62
    %1597 = vmatprep.subr.mxu0 0.0
    %1598 = vmatpush1.msra.mxu0 %v63
    %1599 = vmatprep.subr.mxu0 0.0
    %1600 = vmatpush1.msra.mxu0 %v64
    %1601 = vmatprep.subr.mxu0 0.0
    %1602 = vmatpush1.msra.mxu0 0.0
    %1603 = vmatprep.subr.mxu0 0.0
    %1604 = vmatpush1.msra.mxu0 0.0
    %1605 = vmatprep.subr.mxu0 0.0
    %1606 = vmatpush1.msra.mxu0 0.0
    %1607 = vmatprep.subr.mxu0 0.0
    %1608 = vmatpush1.msra.mxu0 0.0
    %1609 = vmatprep.subr.mxu0 0.0
    %1610 = vmatpush1.msra.mxu0 0.0
    %1611 = vmatprep.subr.mxu0 0.0
    %1612 = vmatpush1.msra.mxu0 0.0
    %1613 = vmatprep.subr.mxu0 0.0
    %1614 = vmatpush1.msra.mxu0 0.0
    %1615 = vmatprep.subr.mxu0 0.0
    %1616 = vmatpush1.msra.mxu0 0.0
    %1617 = vmatprep.subr.mxu0 0.0
    %1618 = vmatpush1.msra.mxu0 0.0
    %1619 = vmatprep.subr.mxu0 0.0
    %1620 = vmatpush1.msra.mxu0 0.0
    %1621 = vmatprep.subr.mxu0 0.0
    %1622 = vmatpush1.msra.mxu0 0.0
    %1623 = vmatprep.subr.mxu0 0.0
    %1624 = vmatpush1.msra.mxu0 0.0
    %1625 = vmatprep.subr.mxu0 0.0
    %1626 = vmatpush1.msra.mxu0 0.0
    %1627 = vmatprep.subr.mxu0 0.0
    %1628 = vmatpush1.msra.mxu0 0.0
    %1629 = vmatprep.subr.mxu0 0.0
    %1630 = vmatpush1.msra.mxu0 0.0
    %1631 = vmatprep.subr.mxu0 0.0
    %1632 = vmatpush1.msra.mxu0 0.0
    %1633 = vmatprep.subr.mxu0 0.0
    %1634 = vmatpush1.msra.mxu0 0.0
    %1635 = vmatprep.subr.mxu0 0.0
    %1636 = vmatpush1.msra.mxu0 0.0
    %1637 = vmatprep.subr.mxu0 0.0
    %1638 = vmatpush1.msra.mxu0 0.0
    %1639 = vmatprep.subr.mxu0 0.0
    %1640 = vmatpush1.msra.mxu0 0.0
    %1641 = vmatprep.subr.mxu0 0.0
    %1642 = vmatpush1.msra.mxu0 0.0
    %1643 = vmatprep.subr.mxu0 0.0
    %1644 = vmatpush1.msra.mxu0 0.0
    %1645 = vmatprep.subr.mxu0 0.0
    %1646 = vmatpush1.msra.mxu0 0.0
    %1647 = vmatprep.subr.mxu0 0.0
    %1648 = vmatpush1.msra.mxu0 0.0
    %1649 = vmatprep.subr.mxu0 0.0
    %1650 = vmatpush1.msra.mxu0 0.0
    %1651 = vmatprep.subr.mxu0 0.0
    %1652 = vmatpush1.msra.mxu0 0.0
    %1653 = vmatprep.subr.mxu0 0.0
    %1654 = vmatpush1.msra.mxu0 0.0
    %1655 = vmatprep.subr.mxu0 0.0
    %1656 = vmatpush1.msra.mxu0 0.0
    %1657 = vmatprep.mubr.f32.mxu0 0.0
    %1658 = vmatmul.mubr.f32.gmra.mrb[0].mxu0 %v1591
    %v1659 = vpop.f32.mrb[0].mxu0
    %v1660 = vadd.f32 0.0, %v1659
    %v1661 = vpop.f32.mrb[0].mxu0
    %1662 = vdwg.mxu0
    %v1665 = vrot.slane %v1588, 7
    %v1666 = vsel %vm145, %v1665, %v1587
    %v1667 = vsel %vm147, %v1666, 0
    %1669 = vmatprep.subr.mxu0 0.0
    %1670 = vmatpush1.msra.mxu0 %v59
    %1671 = vmatprep.subr.mxu0 0.0
    %1672 = vmatpush1.msra.mxu0 %v60
    %1673 = vmatprep.subr.mxu0 0.0
    %1674 = vmatpush1.msra.mxu0 0.0
    %1675 = vmatprep.subr.mxu0 0.0
    %1676 = vmatpush1.msra.mxu0 0.0
    %1677 = vmatprep.subr.mxu0 0.0
    %1678 = vmatpush1.msra.mxu0 0.0
    %1679 = vmatprep.subr.mxu0 0.0
    %1680 = vmatpush1.msra.mxu0 0.0
    %1681 = vmatprep.subr.mxu0 0.0
    %1682 = vmatpush1.msra.mxu0 0.0
    %1683 = vmatprep.subr.mxu0 0.0
    %1684 = vmatpush1.msra.mxu0 0.0
    %1685 = vmatprep.subr.mxu0 0.0
    %1686 = vmatpush1.msra.mxu0 0.0
    %1687 = vmatprep.subr.mxu0 0.0
    %1688 = vmatpush1.msra.mxu0 0.0
    %1689 = vmatprep.subr.mxu0 0.0
    %1690 = vmatpush1.msra.mxu0 0.0
    %1691 = vmatprep.subr.mxu0 0.0
    %1692 = vmatpush1.msra.mxu0 0.0
    %1693 = vmatprep.subr.mxu0 0.0
    %1694 = vmatpush1.msra.mxu0 0.0
    %1695 = vmatprep.subr.mxu0 0.0
    %1696 = vmatpush1.msra.mxu0 0.0
    %1697 = vmatprep.subr.mxu0 0.0
    %1698 = vmatpush1.msra.mxu0 0.0
    %1699 = vmatprep.subr.mxu0 0.0
    %1700 = vmatpush1.msra.mxu0 0.0
    %1701 = vmatprep.subr.mxu0 0.0
    %1702 = vmatpush1.msra.mxu0 0.0
    %1703 = vmatprep.subr.mxu0 0.0
    %1704 = vmatpush1.msra.mxu0 0.0
    %1705 = vmatprep.subr.mxu0 0.0
    %1706 = vmatpush1.msra.mxu0 0.0
    %1707 = vmatprep.subr.mxu0 0.0
    %1708 = vmatpush1.msra.mxu0 0.0
    %1709 = vmatprep.subr.mxu0 0.0
    %1710 = vmatpush1.msra.mxu0 0.0
    %1711 = vmatprep.subr.mxu0 0.0
    %1712 = vmatpush1.msra.mxu0 0.0
    %1713 = vmatprep.subr.mxu0 0.0
    %1714 = vmatpush1.msra.mxu0 0.0
    %1715 = vmatprep.subr.mxu0 0.0
    %1716 = vmatpush1.msra.mxu0 0.0
    %1717 = vmatprep.subr.mxu0 0.0
    %1718 = vmatpush1.msra.mxu0 0.0
    %1719 = vmatprep.subr.mxu0 0.0
    %1720 = vmatpush1.msra.mxu0 0.0
    %1721 = vmatprep.subr.mxu0 0.0
    %1722 = vmatpush1.msra.mxu0 0.0
    %1723 = vmatprep.subr.mxu0 0.0
    %1724 = vmatpush1.msra.mxu0 0.0
    %1725 = vmatprep.subr.mxu0 0.0
    %1726 = vmatpush1.msra.mxu0 0.0
    %1727 = vmatprep.subr.mxu0 0.0
    %1728 = vmatpush1.msra.mxu0 0.0
    %1729 = vmatprep.subr.mxu0 0.0
    %1730 = vmatpush1.msra.mxu0 0.0
    %1731 = vmatprep.subr.mxu0 0.0
    %1732 = vmatpush1.msra.mxu0 0.0
    %1733 = vmatprep.mubr.f32.mxu0 0.0
    %1734 = vmatmul.mubr.f32.gmra.mrb[0].mxu0 %v1667
    %v1735 = vpop.f32.mrb[0].mxu0
    %v1736 = vadd.f32 %v1660, %v1735
    %v1737 = vpop.f32.mrb[0].mxu0
    %1738 = vdwg.mxu0
    %v1739 = vadd.f32 %v1736, %v224
    %v1740 = vxor.u32 %v1739, 2147483648
    %v1741 = vmul.f32 %v1740, 1.442695
    %v1742 = vpow.pop %v1741
    %v1743 = vadd.f32 %v1742, 1.0
    %v1744 = vrcp.pop %v1743
    %v1745 = vmul.f32 1.0, %v1744
    %v1746 = vtanh.pop %v1739
    %v1747 = vmul.f32 %v1745, %v1541
    %1749 = vrot.lane.b32.xlu0 %v1746, 64
    %v1750 = vpop.permute.xlu0 %1749
    %v1752 = vmul.f32 %v1745, %v1750
    %1754 = vrot.lane.b32.xlu0 %v1752, 96
    %v1755 = vpop.permute.xlu0 %1754
    %v1757 = vadd.f32 %v1747, %v1755
    %v1758 = vtanh.pop %v1757
    %1760 = vrot.lane.b32.xlu0 %v1758, 64
    %v1761 = vpop.permute.xlu0 %1760
    %v1763 = vmul.f32 %v1745, %v1761
    %v1766 = vunpack.c.l.s4 1966171168
    %v1767 = vunpack.c.0.s8 %v1766
    %v1768 = vlaneseq
    %v1769 = vshrl.u32 %v1768, 7
    %v1770 = vsub.s32 %v1767, %v1769
    %v1771 = vrot.slane %v1763, %v1770
    %v1772 = vcombine.high %v1771, %v1771
    %v1774 = vunpack.c.l.s4 1966171168
    %v1775 = vunpack.c.0.s8 %v1774
    %v1776 = vlaneseq
    %v1777 = vshrl.u32 %v1776, 7
    %v1778 = vsub.s32 %v1775, %v1777
    %v1779 = vrot.slane %v1771, %v1778
    %v1781 = vunpack.c.l.s4 1966171168
    %v1782 = vunpack.c.0.s8 %v1781
    %v1783 = vlaneseq
    %v1784 = vshrl.u32 %v1783, 7
    %v1785 = vsub.s32 %v1782, %v1784
    %v1786 = vrot.slane %v1772, %v1785
    %v1787 = vlaneseq
    %v1788 = vshrl.u32 %v1787, 7
    %v1789 = vsub.s32 0, %v1788
    %v1790 = vrot.slane %v1779, %v1789
    %v1791 = vlaneseq
    %v1792 = vshrl.u32 %v1791, 7
    %v1793 = vsub.s32 0, %v1792
    %v1794 = vrot.slane %v1786, %v1793
    %1795 = vrot.lane.b32.xlu0 %v1790, 64
    %v1796 = vpop.permute.xlu0 %1795
    %1797 = vrot.lane.b32.xlu0 %v1794, 64
    %v1798 = vpop.permute.xlu0 %1797
    %1801 = vst.msk [vmem:[#allocation8] sm:$0x1] %vm288, %v1796
    %1802 = vst.msk [vmem:[#allocation8 + $0x8] sm:$0x1] %vm288, %v1798
    // Predicated region
    $region30: #{my_lstm_forward.1} parent=1 // pred_check
      _
    $region31: #{my_lstm_forward.1} parent=1 // pred_check_branch
      %1804 = sbr.rel (0) target = $region33
    $region32: #{my_lstm_forward.1} parent=1 // pred_region
      %s1806 = ssub.s32 256, 256
      %1807 = vsyncadd [#allocation4], %s1806
      %s1808 = sshll.u32 [#allocation8], 4
      %s1809 = int_to_ptr.vmem [resolvable:$true] %s1808
      %1814 = dma.vmem_to_hbm [thread:$0]  %s1809, 256, %s4, [#allocation4], 128, 128, 8
    $region33: #{my_lstm_forward.1} parent=1 // pred_fallthru
      _
    // Predicated region
    $region34: #{my_lstm_forward.1} parent=1 // pred_check
      _
    $region35: #{my_lstm_forward.1} parent=1 // pred_check_branch
      %1816 = sbr.rel (0) target = $region37
    $region36: #{my_lstm_forward.1} parent=1 // pred_region
      %1817 = dma.done [#allocation4], 256
    $region37: #{my_lstm_forward.1} parent=1 // pred_fallthru
      _
    %1818 = vsyncpa [#allocation3], 1
    %1819 = vsyncpa [#allocation6], 1
    %1820 = vsyncpa [#allocation4], 1

</llo_original>
